<compile_context>
chip_gen: v5e
topology: v5e:2x2
jax: 0.10.0
libtpu: 0.0.40
codegen_flags: <defaults>
</compile_context>

<pallas_src>
import numpy as np
import jax
import jax.numpy as jnp
from jax import lax
from jax.experimental import pallas as pl
from jax.experimental.pallas import tpu as pltpu

NUM_HEADS = 4


# ----------------------- fused LSTM + attention + FC kernel -----------------------
def make_fused_kernel(num_layers, T, Bp, H, NH):
    dh = H // NH
    G = 4 * H

    def kernel(*refs):
        idx = 0
        x_ref = refs[idx]; idx += 1                        # (T*Bp, Din) bf16, time-major
        lstm_refs = []
        for _ in range(num_layers):
            lstm_refs.append(refs[idx:idx + 3]); idx += 3  # (wih, whh, bias) per layer
        (wq_ref, wk_ref, wv_ref, bq_ref, bk_ref, bv_ref,
         wo_ref, bo_ref, w1_ref, b1_ref, w2_ref, b2_ref,
         hmat_ref, hmat_t_ref) = refs[idx:idx + 14]
        idx += 14
        out_ref = refs[idx]; idx += 1
        seq_ref, gx_ref = refs[idx], refs[idx + 1]         # (T*Bp,H) bf16 / (T*Bp,4H) f32

        # ----------------- fused LSTM stack: activations stay in VMEM -----------------
        for li, (wih_ref, whh_ref, b_ref) in enumerate(lstm_refs):
            inp = x_ref[...] if li == 0 else seq_ref[...]          # (T*Bp, din) bf16
            # Hoisted input projection: ONE MXU matmul over all T*Bp rows (+ fused bias)
            # instead of T tiny matmuls inside the serial recurrence.
            gx_ref[...] = (jnp.dot(inp, wih_ref[...],
                                   preferred_element_type=jnp.float32)
                           + b_ref[...])                           # (T*Bp, 4H) f32
            whh = whh_ref[...]                                     # (H, 4H) bf16
            # TODO(synk): hold `whh` in MXU weight regs across the recurrence at real H
            # via pltpu.matmul_push_rhs / matmul_acc_lhs / matmul_pop.

            def step(t, carry, whh=whh):
                h, c = carry                                       # f32 (Bp, H)
                row = pl.multiple_of(t * Bp, Bp)
                gates = gx_ref[pl.ds(row, Bp), :] + jnp.dot(
                    h.astype(jnp.bfloat16), whh,
                    preferred_element_type=jnp.float32)            # (Bp, 4H) f32
                if G <= 128:
                    # 4H fits one 128-lane vreg: two full-width EUP passes + lane slices.
                    sg = jax.nn.sigmoid(gates)
                    tg = jnp.tanh(gates)
                    i = sg[:, 0 * H:1 * H]
                    f = sg[:, 1 * H:2 * H]
                    o = sg[:, 3 * H:4 * H]
                    g = tg[:, 2 * H:3 * H]
                else:
                    # Real H: gate blocks are 128-lane aligned; exact per-gate EUP ops.
                    i = jax.nn.sigmoid(gates[:, 0 * H:1 * H])
                    f = jax.nn.sigmoid(gates[:, 1 * H:2 * H])
                    g = jnp.tanh(gates[:, 2 * H:3 * H])
                    o = jax.nn.sigmoid(gates[:, 3 * H:4 * H])
                c_new = f * c + i * g
                h_new = o * jnp.tanh(c_new)
                seq_ref[pl.ds(row, Bp), :] = h_new.astype(jnp.bfloat16)
                return (h_new, c_new)

            zeros = jnp.zeros((Bp, H), jnp.float32)
            lax.fori_loop(0, T, step, (zeros, zeros), unroll=True)

        # -------------- multi-head attention (last query only) + FC head --------------
        seq = seq_ref[...]                                         # (T*Bp, H) bf16
        scale = float(1.0 / np.sqrt(dh))

        q = (jnp.dot(seq[(T - 1) * Bp:, :], wq_ref[...],
                     preferred_element_type=jnp.float32) + bq_ref[...]) * scale  # (Bp,H)
        k = jnp.dot(seq, wk_ref[...], preferred_element_type=jnp.float32) + bk_ref[...]
        v = jnp.dot(seq, wv_ref[...], preferred_element_type=jnp.float32) + bv_ref[...]

        # Vectorized over heads: per-head lane-group reduce / broadcast expressed as
        # tiny precomputed head-indicator matmuls (no per-head slicing / concatenate).
        qk = (k.reshape(T, Bp, H) * q[None, :, :]).reshape(T * Bp, H)
        scores = jnp.dot(qk, hmat_ref[...],
                         preferred_element_type=jnp.float32).reshape(T, Bp, NH)
        m = jnp.max(scores, axis=0, keepdims=True)
        p = jnp.exp(scores - m)
        denom = jnp.sum(p, axis=0, keepdims=True)
        p = p * pl.reciprocal(denom, approx=True)
        p_full = jnp.dot(p.reshape(T * Bp, NH), hmat_t_ref[...],
                         preferred_element_type=jnp.float32)       # (T*Bp, H)
        attn = jnp.sum((p_full * v).reshape(T, Bp, H), axis=0)     # (Bp, H)
        # TODO(synk): at non-toy T, turn the p_full*v T-deep reduction into per-head MXU
        # contractions instead of a VPU/XLU reduction chain.

        attn = (jnp.dot(attn.astype(jnp.bfloat16), wo_ref[...],
                        preferred_element_type=jnp.float32) + bo_ref[...])
        # fc: Linear -> ReLU -> (Dropout = identity at eval) -> Linear
        h1 = jnp.maximum(
            jnp.dot(attn.astype(jnp.bfloat16), w1_ref[...],
                    preferred_element_type=jnp.float32) + b1_ref[...], 0.0)
        out_ref[...] = (jnp.dot(h1.astype(jnp.bfloat16), w2_ref[...],
                                preferred_element_type=jnp.float32) + b2_ref[...])

    return kernel


# ----------------------------------- Wrapper ---------------------------------------
def lstm_module_forward(x, p):
    B, T, Din = x.shape
    H = p["lstm"][0]["whh_t"].shape[0]
    num_layers = len(p["lstm"])
    out_dim = p["w2_t"].shape[1]
    NH = NUM_HEADS

    # Pad batch to fill 8 sublanes (padded rows are valid-but-discarded work).
    Bp = max(8, ((B + 7) // 8) * 8)

    # Lane-dense 2-D time-major input: (T, B, Din) -> pad B -> (T*Bp, Din) bf16.
    x_tm = jnp.transpose(x, (1, 0, 2))
    x_tm = jnp.pad(x_tm, ((0, 0), (0, Bp - B), (0, 0)))
    x2d = x_tm.reshape(T * Bp, Din).astype(jnp.bfloat16)

    # Precomputed head-indicator matrices (hoisted out of the kernel).
    dh = H // NH
    head_ids = np.repeat(np.arange(NH), dh)                       # (H,)
    head_mat = jnp.asarray(head_ids[:, None] == np.arange(NH)[None, :], jnp.float32)
    head_mat_t = jnp.asarray(head_mat.T)                          # (NH, H)

    inputs = [x2d]
    for lp in p["lstm"]:
        inputs += [lp["wih_t"], lp["whh_t"], lp["bias"]]
    inputs += [p["wq_t"], p["wk_t"], p["wv_t"], p["bq"], p["bk"], p["bv"],
               p["wo_t"], p["bo"], p["w1_t"], p["b1"], p["w2_t"], p["b2"],
               head_mat, head_mat_t]

    kernel = make_fused_kernel(num_layers, T, Bp, H, NH)
    out = pl.pallas_call(
        kernel,
        out_shape=jax.ShapeDtypeStruct((Bp, out_dim), jnp.float32),
        in_specs=[pl.BlockSpec(memory_space=pltpu.MemorySpace.VMEM)] * len(inputs),
        out_specs=pl.BlockSpec(memory_space=pltpu.MemorySpace.VMEM),
        scratch_shapes=[pltpu.VMEM((T * Bp, H), jnp.bfloat16),      # seq (bf16, halved)
                        pltpu.VMEM((T * Bp, 4 * H), jnp.float32)],  # hoisted gate proj
        # Headroom under v7x's 64 MiB physical VMEM.
        compiler_params=pltpu.CompilerParams(vmem_limit_bytes=48 * 1024 * 1024),
    )(*inputs)
    return out[:B]


# -------------------------------- Parameter init -----------------------------------
def init_params(key, input_dim, hidden_dim, num_layers, output_dim):
    H = hidden_dim

    def unif(k, shape, bound):
        return jax.random.uniform(k, shape, jnp.float32, -bound, bound)

    keys = iter(jax.random.split(key, 64))
    bound = 1.0 / np.sqrt(H)

    lstm = []
    d_in = input_dim
    for _ in range(num_layers):
        wih = unif(next(keys), (4 * H, d_in), bound)     # PyTorch weight_ih_l{k}
        whh = unif(next(keys), (4 * H, H), bound)        # PyTorch weight_hh_l{k}
        bih = unif(next(keys), (4 * H,), bound)
        bhh = unif(next(keys), (4 * H,), bound)
        lstm.append(dict(wih_t=wih.T, whh_t=whh.T, bias=(bih + bhh)[None, :]))
        d_in = H

    in_proj_w = unif(next(keys), (3 * H, H), bound)      # MHA in_proj_weight
    in_proj_b = unif(next(keys), (3 * H,), bound)
    out_w = unif(next(keys), (H, H), bound)              # MHA out_proj
    out_b = unif(next(keys), (H,), bound)

    H2 = H // 2
    w1 = unif(next(keys), (H2, H), 1.0 / np.sqrt(H))
    b1 = unif(next(keys), (H2,), 1.0 / np.sqrt(H))
    w2 = unif(next(keys), (output_dim, H2), 1.0 / np.sqrt(H2))
    b2 = unif(next(keys), (output_dim,), 1.0 / np.sqrt(H2))

    return dict(
        lstm=lstm,
        wq_t=in_proj_w[0:H].T, wk_t=in_proj_w[H:2 * H].T, wv_t=in_proj_w[2 * H:].T,
        bq=in_proj_b[0:H][None, :], bk=in_proj_b[H:2 * H][None, :],
        bv=in_proj_b[2 * H:][None, :],
        wo_t=out_w.T, bo=out_b[None, :],
        w1_t=w1.T, b1=b1[None, :], w2_t=w2.T, b2=b2[None, :],
    )


def prep_kernel_params(params):
    """Cast matmul weight matrices to bf16 (MXU-native); biases stay f32."""
    bf = lambda w: w.astype(jnp.bfloat16)
    kp = dict(params)
    kp["lstm"] = [dict(wih_t=bf(lp["wih_t"]), whh_t=bf(lp["whh_t"]), bias=lp["bias"])
                  for lp in params["lstm"]]
    for k in ("wq_t", "wk_t", "wv_t", "wo_t", "w1_t", "w2_t"):
        kp[k] = bf(params[k])
    return kp


# ------------------------------ Pure-JAX reference ----------------------------------
def reference_forward(x, params):
    B = x.shape[0]
    h_seq = jnp.transpose(x, (1, 0, 2))
    for lp in params["lstm"]:
        H = lp["whh_t"].shape[0]

        def step(carry, x_t, lp=lp, H=H):
            h, c = carry
            gates = x_t @ lp["wih_t"] + h @ lp["whh_t"] + lp["bias"]
            i = jax.nn.sigmoid(gates[:, :H])
            f = jax.nn.sigmoid(gates[:, H:2 * H])
            g = jnp.tanh(gates[:, 2 * H:3 * H])
            o = jax.nn.sigmoid(gates[:, 3 * H:])
            c = f * c + i * g
            h = o * jnp.tanh(c)
            return (h, c), h

        init = (jnp.zeros((B, H), jnp.float32), jnp.zeros((B, H), jnp.float32))
        _, h_seq = lax.scan(step, init, h_seq)
    seq = jnp.transpose(h_seq, (1, 0, 2))                # (B, T, H)

    H = seq.shape[-1]
    dh = H // NUM_HEADS
    q = seq[:, -1, :] @ params["wq_t"] + params["bq"]
    k = seq @ params["wk_t"] + params["bk"]
    v = seq @ params["wv_t"] + params["bv"]
    scale = 1.0 / np.sqrt(dh)
    outs = []
    for hh in range(NUM_HEADS):
        sl = slice(hh * dh, (hh + 1) * dh)
        qh = q[:, sl] * scale
        kh, vh = k[:, :, sl], v[:, :, sl]
        scores = jnp.einsum("bd,btd->bt", qh, kh)
        p = jax.nn.softmax(scores, axis=-1)
        outs.append(jnp.einsum("bt,btd->bd", p, vh))
    attn = jnp.concatenate(outs, -1) @ params["wo_t"] + params["bo"]
    h1 = jax.nn.relu(attn @ params["w1_t"] + params["b1"])
    return h1 @ params["w2_t"] + params["b2"]


if __name__ == "__main__":
    B, T = 2, 8
    input_dim, hidden_dim, num_layers, output_dim = 8, 32, 2, 3  # dropout ignored (eval)

    key = jax.random.PRNGKey(0)
    kx, kp = jax.random.split(key)
    x = jax.random.normal(kx, (B, T, input_dim), jnp.float32)
    params = init_params(kp, input_dim, hidden_dim, num_layers, output_dim)
    kparams = prep_kernel_params(params)

    out = jax.jit(lambda xi: lstm_module_forward(xi, kparams))(x)
    out = jax.block_until_ready(out)

    ref = jax.block_until_ready(reference_forward(x, params))
    # Tolerance sized for bf16 matmul operands / bf16 seq scratch (f32 accumulation &
    # recurrent state) vs f32 reference; approx reciprocal in softmax is benign.
    np.testing.assert_allclose(np.asarray(out), np.asarray(ref), rtol=2e-2, atol=1e-2)
    print("KERNEL_OK")
</pallas_src>

<mosaic_0001>
module attributes {stable_mosaic.version = 11 : i64} {
  func.func @kernel(%arg0: memref<64x8xbf16, #tpu.memory_space<vmem>>, %arg1: memref<8x128xbf16, #tpu.memory_space<vmem>>, %arg2: memref<32x128xbf16, #tpu.memory_space<vmem>>, %arg3: memref<1x128xf32, #tpu.memory_space<vmem>>, %arg4: memref<32x128xbf16, #tpu.memory_space<vmem>>, %arg5: memref<32x128xbf16, #tpu.memory_space<vmem>>, %arg6: memref<1x128xf32, #tpu.memory_space<vmem>>, %arg7: memref<32x32xbf16, #tpu.memory_space<vmem>>, %arg8: memref<32x32xbf16, #tpu.memory_space<vmem>>, %arg9: memref<32x32xbf16, #tpu.memory_space<vmem>>, %arg10: memref<1x32xf32, #tpu.memory_space<vmem>>, %arg11: memref<1x32xf32, #tpu.memory_space<vmem>>, %arg12: memref<1x32xf32, #tpu.memory_space<vmem>>, %arg13: memref<32x32xbf16, #tpu.memory_space<vmem>>, %arg14: memref<1x32xf32, #tpu.memory_space<vmem>>, %arg15: memref<32x16xbf16, #tpu.memory_space<vmem>>, %arg16: memref<1x16xf32, #tpu.memory_space<vmem>>, %arg17: memref<16x3xbf16, #tpu.memory_space<vmem>>, %arg18: memref<1x3xf32, #tpu.memory_space<vmem>>, %arg19: memref<32x4xf32, #tpu.memory_space<vmem>>, %arg20: memref<4x32xf32, #tpu.memory_space<vmem>>, %arg21: memref<8x3xf32, #tpu.memory_space<vmem>>, %arg22: memref<64x32xbf16, #tpu.memory_space<vmem>>, %arg23: memref<64x128xf32, #tpu.memory_space<vmem>>) attributes {dimension_semantics = [], scalar_prefetch = 0 : i64, scratch_operands = 2 : i64, tpu.core_type = #tpu.core_type<tc>} {
    %c0 = arith.constant 0 : index
    %c0_0 = arith.constant 0 : index
    %0 = vector.load %arg0[%c0, %c0_0] : memref<64x8xbf16, #tpu.memory_space<vmem>>, vector<64x8xbf16>
    %c0_1 = arith.constant 0 : index
    %c0_2 = arith.constant 0 : index
    %1 = vector.load %arg1[%c0_1, %c0_2] : memref<8x128xbf16, #tpu.memory_space<vmem>>, vector<8x128xbf16>
    %cst = arith.constant dense<0.000000e+00> : vector<64x128xf32>
    %2 = tpu.matmul %0, %1, %cst {dimension_numbers = #tpu.dot_dimension_numbers<[1], [0], [0], [1], [0, 0, 1, 1], [], []>} : vector<64x8xbf16>, vector<8x128xbf16>, vector<64x128xf32> -> vector<64x128xf32>
    %c0_3 = arith.constant 0 : index
    %c0_4 = arith.constant 0 : index
    %3 = vector.load %arg3[%c0_3, %c0_4] : memref<1x128xf32, #tpu.memory_space<vmem>>, vector<1x128xf32>
    %4 = vector.broadcast %3 : vector<1x128xf32> to vector<64x128xf32>
    %5 = arith.addf %2, %4 : vector<64x128xf32>
    %c0_5 = arith.constant 0 : index
    %c0_6 = arith.constant 0 : index
    %6 = vector.load %arg23[%c0_5, %c0_6] : memref<64x128xf32, #tpu.memory_space<vmem>>, vector<64x128xf32>
    tpu.vector_store %arg23[%c0_5, %c0_6], %5 {strides = array<i32>} : memref<64x128xf32, #tpu.memory_space<vmem>>, vector<64x128xf32>,
    %c0_7 = arith.constant 0 : index
    %c0_8 = arith.constant 0 : index
    %7 = vector.load %arg2[%c0_7, %c0_8] : memref<32x128xbf16, #tpu.memory_space<vmem>>, vector<32x128xbf16>
    %cst_9 = arith.constant 0.000000e+00 : f32
    %8 = vector.broadcast %cst_9 : f32 to vector<8x32xf32>
    %c0_i32 = arith.constant 0 : i32
    %c8_i32 = arith.constant 8 : i32
    %9 = arith.muli %c0_i32, %c8_i32 : i32
    %10 = tpu.assume_multiple %9, 8 : i32
    %11 = arith.index_cast %10 : i32 to index
    %c0_10 = arith.constant 0 : index
    %12 = vector.load %arg23[%11, %c0_10] : memref<64x128xf32, #tpu.memory_space<vmem>>, vector<8x128xf32>
    %13 = arith.truncf %8 : vector<8x32xf32> to vector<8x32xbf16>
    %cst_11 = arith.constant dense<0.000000e+00> : vector<8x128xf32>
    %14 = tpu.matmul %13, %7, %cst_11 {dimension_numbers = #tpu.dot_dimension_numbers<[1], [0], [0], [1], [0, 0, 1, 1], [], []>} : vector<8x32xbf16>, vector<32x128xbf16>, vector<8x128xf32> -> vector<8x128xf32>
    %15 = arith.addf %12, %14 : vector<8x128xf32>
    %16 = arith.negf %15 : vector<8x128xf32>
    %17 = math.exp %16 : vector<8x128xf32>
    %cst_12 = arith.constant 1.000000e+00 : f32
    %18 = vector.broadcast %cst_12 : f32 to vector<8x128xf32>
    %19 = arith.addf %18, %17 : vector<8x128xf32>
    %20 = arith.divf %18, %19 : vector<8x128xf32>
    %21 = math.tanh %15 : vector<8x128xf32>
    %22 = vector.extract_strided_slice %20 {offsets = [0, 0], sizes = [8, 32], strides = [1, 1]} : vector<8x128xf32> to vector<8x32xf32>
    %23 = vector.extract_strided_slice %20 {offsets = [0, 32], sizes = [8, 32], strides = [1, 1]} : vector<8x128xf32> to vector<8x32xf32>
    %24 = vector.extract_strided_slice %20 {offsets = [0, 96], sizes = [8, 32], strides = [1, 1]} : vector<8x128xf32> to vector<8x32xf32>
    %25 = vector.extract_strided_slice %21 {offsets = [0, 64], sizes = [8, 32], strides = [1, 1]} : vector<8x128xf32> to vector<8x32xf32>
    %26 = arith.mulf %23, %8 : vector<8x32xf32>
    %27 = arith.mulf %22, %25 : vector<8x32xf32>
    %28 = arith.addf %26, %27 : vector<8x32xf32>
    %29 = math.tanh %28 : vector<8x32xf32>
    %30 = arith.mulf %24, %29 : vector<8x32xf32>
    %31 = arith.truncf %30 : vector<8x32xf32> to vector<8x32xbf16>
    %32 = arith.index_cast %10 : i32 to index
    %c0_13 = arith.constant 0 : index
    %33 = vector.load %arg22[%32, %c0_13] : memref<64x32xbf16, #tpu.memory_space<vmem>>, vector<8x32xbf16>
    tpu.vector_store %arg22[%32, %c0_13], %31 {strides = array<i32>} : memref<64x32xbf16, #tpu.memory_space<vmem>>, vector<8x32xbf16>,
    %c1_i32 = arith.constant 1 : i32
    %c8_i32_14 = arith.constant 8 : i32
    %34 = arith.muli %c1_i32, %c8_i32_14 : i32
    %35 = tpu.assume_multiple %34, 8 : i32
    %36 = arith.index_cast %35 : i32 to index
    %c0_15 = arith.constant 0 : index
    %37 = vector.load %arg23[%36, %c0_15] : memref<64x128xf32, #tpu.memory_space<vmem>>, vector<8x128xf32>
    %38 = arith.truncf %30 : vector<8x32xf32> to vector<8x32xbf16>
    %cst_16 = arith.constant dense<0.000000e+00> : vector<8x128xf32>
    %39 = tpu.matmul %38, %7, %cst_16 {dimension_numbers = #tpu.dot_dimension_numbers<[1], [0], [0], [1], [0, 0, 1, 1], [], []>} : vector<8x32xbf16>, vector<32x128xbf16>, vector<8x128xf32> -> vector<8x128xf32>
    %40 = arith.addf %37, %39 : vector<8x128xf32>
    %41 = arith.negf %40 : vector<8x128xf32>
    %42 = math.exp %41 : vector<8x128xf32>
    %cst_17 = arith.constant 1.000000e+00 : f32
    %43 = vector.broadcast %cst_17 : f32 to vector<8x128xf32>
    %44 = arith.addf %43, %42 : vector<8x128xf32>
    %45 = arith.divf %43, %44 : vector<8x128xf32>
    %46 = math.tanh %40 : vector<8x128xf32>
    %47 = vector.extract_strided_slice %45 {offsets = [0, 0], sizes = [8, 32], strides = [1, 1]} : vector<8x128xf32> to vector<8x32xf32>
    %48 = vector.extract_strided_slice %45 {offsets = [0, 32], sizes = [8, 32], strides = [1, 1]} : vector<8x128xf32> to vector<8x32xf32>
    %49 = vector.extract_strided_slice %45 {offsets = [0, 96], sizes = [8, 32], strides = [1, 1]} : vector<8x128xf32> to vector<8x32xf32>
    %50 = vector.extract_strided_slice %46 {offsets = [0, 64], sizes = [8, 32], strides = [1, 1]} : vector<8x128xf32> to vector<8x32xf32>
    %51 = arith.mulf %48, %28 : vector<8x32xf32>
    %52 = arith.mulf %47, %50 : vector<8x32xf32>
    %53 = arith.addf %51, %52 : vector<8x32xf32>
    %54 = math.tanh %53 : vector<8x32xf32>
    %55 = arith.mulf %49, %54 : vector<8x32xf32>
    %56 = arith.truncf %55 : vector<8x32xf32> to vector<8x32xbf16>
    %57 = arith.index_cast %35 : i32 to index
    %c0_18 = arith.constant 0 : index
    %58 = vector.load %arg22[%57, %c0_18] : memref<64x32xbf16, #tpu.memory_space<vmem>>, vector<8x32xbf16>
    tpu.vector_store %arg22[%57, %c0_18], %56 {strides = array<i32>} : memref<64x32xbf16, #tpu.memory_space<vmem>>, vector<8x32xbf16>,
    %c2_i32 = arith.constant 2 : i32
    %c8_i32_19 = arith.constant 8 : i32
    %59 = arith.muli %c2_i32, %c8_i32_19 : i32
    %60 = tpu.assume_multiple %59, 8 : i32
    %61 = arith.index_cast %60 : i32 to index
    %c0_20 = arith.constant 0 : index
    %62 = vector.load %arg23[%61, %c0_20] : memref<64x128xf32, #tpu.memory_space<vmem>>, vector<8x128xf32>
    %63 = arith.truncf %55 : vector<8x32xf32> to vector<8x32xbf16>
    %cst_21 = arith.constant dense<0.000000e+00> : vector<8x128xf32>
    %64 = tpu.matmul %63, %7, %cst_21 {dimension_numbers = #tpu.dot_dimension_numbers<[1], [0], [0], [1], [0, 0, 1, 1], [], []>} : vector<8x32xbf16>, vector<32x128xbf16>, vector<8x128xf32> -> vector<8x128xf32>
    %65 = arith.addf %62, %64 : vector<8x128xf32>
    %66 = arith.negf %65 : vector<8x128xf32>
    %67 = math.exp %66 : vector<8x128xf32>
    %cst_22 = arith.constant 1.000000e+00 : f32
    %68 = vector.broadcast %cst_22 : f32 to vector<8x128xf32>
    %69 = arith.addf %68, %67 : vector<8x128xf32>
    %70 = arith.divf %68, %69 : vector<8x128xf32>
    %71 = math.tanh %65 : vector<8x128xf32>
    %72 = vector.extract_strided_slice %70 {offsets = [0, 0], sizes = [8, 32], strides = [1, 1]} : vector<8x128xf32> to vector<8x32xf32>
    %73 = vector.extract_strided_slice %70 {offsets = [0, 32], sizes = [8, 32], strides = [1, 1]} : vector<8x128xf32> to vector<8x32xf32>
    %74 = vector.extract_strided_slice %70 {offsets = [0, 96], sizes = [8, 32], strides = [1, 1]} : vector<8x128xf32> to vector<8x32xf32>
    %75 = vector.extract_strided_slice %71 {offsets = [0, 64], sizes = [8, 32], strides = [1, 1]} : vector<8x128xf32> to vector<8x32xf32>
    %76 = arith.mulf %73, %53 : vector<8x32xf32>
    %77 = arith.mulf %72, %75 : vector<8x32xf32>
    %78 = arith.addf %76, %77 : vector<8x32xf32>
    %79 = math.tanh %78 : vector<8x32xf32>
    %80 = arith.mulf %74, %79 : vector<8x32xf32>
    %81 = arith.truncf %80 : vector<8x32xf32> to vector<8x32xbf16>
    %82 = arith.index_cast %60 : i32 to index
    %c0_23 = arith.constant 0 : index
    %83 = vector.load %arg22[%82, %c0_23] : memref<64x32xbf16, #tpu.memory_space<vmem>>, vector<8x32xbf16>
    tpu.vector_store %arg22[%82, %c0_23], %81 {strides = array<i32>} : memref<64x32xbf16, #tpu.memory_space<vmem>>, vector<8x32xbf16>,
    %c3_i32 = arith.constant 3 : i32
    %c8_i32_24 = arith.constant 8 : i32
    %84 = arith.muli %c3_i32, %c8_i32_24 : i32
    %85 = tpu.assume_multiple %84, 8 : i32
    %86 = arith.index_cast %85 : i32 to index
    %c0_25 = arith.constant 0 : index
    %87 = vector.load %arg23[%86, %c0_25] : memref<64x128xf32, #tpu.memory_space<vmem>>, vector<8x128xf32>
    %88 = arith.truncf %80 : vector<8x32xf32> to vector<8x32xbf16>
    %cst_26 = arith.constant dense<0.000000e+00> : vector<8x128xf32>
    %89 = tpu.matmul %88, %7, %cst_26 {dimension_numbers = #tpu.dot_dimension_numbers<[1], [0], [0], [1], [0, 0, 1, 1], [], []>} : vector<8x32xbf16>, vector<32x128xbf16>, vector<8x128xf32> -> vector<8x128xf32>
    %90 = arith.addf %87, %89 : vector<8x128xf32>
    %91 = arith.negf %90 : vector<8x128xf32>
    %92 = math.exp %91 : vector<8x128xf32>
    %cst_27 = arith.constant 1.000000e+00 : f32
    %93 = vector.broadcast %cst_27 : f32 to vector<8x128xf32>
    %94 = arith.addf %93, %92 : vector<8x128xf32>
    %95 = arith.divf %93, %94 : vector<8x128xf32>
    %96 = math.tanh %90 : vector<8x128xf32>
    %97 = vector.extract_strided_slice %95 {offsets = [0, 0], sizes = [8, 32], strides = [1, 1]} : vector<8x128xf32> to vector<8x32xf32>
    %98 = vector.extract_strided_slice %95 {offsets = [0, 32], sizes = [8, 32], strides = [1, 1]} : vector<8x128xf32> to vector<8x32xf32>
    %99 = vector.extract_strided_slice %95 {offsets = [0, 96], sizes = [8, 32], strides = [1, 1]} : vector<8x128xf32> to vector<8x32xf32>
    %100 = vector.extract_strided_slice %96 {offsets = [0, 64], sizes = [8, 32], strides = [1, 1]} : vector<8x128xf32> to vector<8x32xf32>
    %101 = arith.mulf %98, %78 : vector<8x32xf32>
    %102 = arith.mulf %97, %100 : vector<8x32xf32>
    %103 = arith.addf %101, %102 : vector<8x32xf32>
    %104 = math.tanh %103 : vector<8x32xf32>
    %105 = arith.mulf %99, %104 : vector<8x32xf32>
    %106 = arith.truncf %105 : vector<8x32xf32> to vector<8x32xbf16>
    %107 = arith.index_cast %85 : i32 to index
    %c0_28 = arith.constant 0 : index
    %108 = vector.load %arg22[%107, %c0_28] : memref<64x32xbf16, #tpu.memory_space<vmem>>, vector<8x32xbf16>
    tpu.vector_store %arg22[%107, %c0_28], %106 {strides = array<i32>} : memref<64x32xbf16, #tpu.memory_space<vmem>>, vector<8x32xbf16>,
    %c4_i32 = arith.constant 4 : i32
    %c8_i32_29 = arith.constant 8 : i32
    %109 = arith.muli %c4_i32, %c8_i32_29 : i32
    %110 = tpu.assume_multiple %109, 8 : i32
    %111 = arith.index_cast %110 : i32 to index
    %c0_30 = arith.constant 0 : index
    %112 = vector.load %arg23[%111, %c0_30] : memref<64x128xf32, #tpu.memory_space<vmem>>, vector<8x128xf32>
    %113 = arith.truncf %105 : vector<8x32xf32> to vector<8x32xbf16>
    %cst_31 = arith.constant dense<0.000000e+00> : vector<8x128xf32>
    %114 = tpu.matmul %113, %7, %cst_31 {dimension_numbers = #tpu.dot_dimension_numbers<[1], [0], [0], [1], [0, 0, 1, 1], [], []>} : vector<8x32xbf16>, vector<32x128xbf16>, vector<8x128xf32> -> vector<8x128xf32>
    %115 = arith.addf %112, %114 : vector<8x128xf32>
    %116 = arith.negf %115 : vector<8x128xf32>
    %117 = math.exp %116 : vector<8x128xf32>
    %cst_32 = arith.constant 1.000000e+00 : f32
    %118 = vector.broadcast %cst_32 : f32 to vector<8x128xf32>
    %119 = arith.addf %118, %117 : vector<8x128xf32>
    %120 = arith.divf %118, %119 : vector<8x128xf32>
    %121 = math.tanh %115 : vector<8x128xf32>
    %122 = vector.extract_strided_slice %120 {offsets = [0, 0], sizes = [8, 32], strides = [1, 1]} : vector<8x128xf32> to vector<8x32xf32>
    %123 = vector.extract_strided_slice %120 {offsets = [0, 32], sizes = [8, 32], strides = [1, 1]} : vector<8x128xf32> to vector<8x32xf32>
    %124 = vector.extract_strided_slice %120 {offsets = [0, 96], sizes = [8, 32], strides = [1, 1]} : vector<8x128xf32> to vector<8x32xf32>
    %125 = vector.extract_strided_slice %121 {offsets = [0, 64], sizes = [8, 32], strides = [1, 1]} : vector<8x128xf32> to vector<8x32xf32>
    %126 = arith.mulf %123, %103 : vector<8x32xf32>
    %127 = arith.mulf %122, %125 : vector<8x32xf32>
    %128 = arith.addf %126, %127 : vector<8x32xf32>
    %129 = math.tanh %128 : vector<8x32xf32>
    %130 = arith.mulf %124, %129 : vector<8x32xf32>
    %131 = arith.truncf %130 : vector<8x32xf32> to vector<8x32xbf16>
    %132 = arith.index_cast %110 : i32 to index
    %c0_33 = arith.constant 0 : index
    %133 = vector.load %arg22[%132, %c0_33] : memref<64x32xbf16, #tpu.memory_space<vmem>>, vector<8x32xbf16>
    tpu.vector_store %arg22[%132, %c0_33], %131 {strides = array<i32>} : memref<64x32xbf16, #tpu.memory_space<vmem>>, vector<8x32xbf16>,
    %c5_i32 = arith.constant 5 : i32
    %c8_i32_34 = arith.constant 8 : i32
    %134 = arith.muli %c5_i32, %c8_i32_34 : i32
    %135 = tpu.assume_multiple %134, 8 : i32
    %136 = arith.index_cast %135 : i32 to index
    %c0_35 = arith.constant 0 : index
    %137 = vector.load %arg23[%136, %c0_35] : memref<64x128xf32, #tpu.memory_space<vmem>>, vector<8x128xf32>
    %138 = arith.truncf %130 : vector<8x32xf32> to vector<8x32xbf16>
    %cst_36 = arith.constant dense<0.000000e+00> : vector<8x128xf32>
    %139 = tpu.matmul %138, %7, %cst_36 {dimension_numbers = #tpu.dot_dimension_numbers<[1], [0], [0], [1], [0, 0, 1, 1], [], []>} : vector<8x32xbf16>, vector<32x128xbf16>, vector<8x128xf32> -> vector<8x128xf32>
    %140 = arith.addf %137, %139 : vector<8x128xf32>
    %141 = arith.negf %140 : vector<8x128xf32>
    %142 = math.exp %141 : vector<8x128xf32>
    %cst_37 = arith.constant 1.000000e+00 : f32
    %143 = vector.broadcast %cst_37 : f32 to vector<8x128xf32>
    %144 = arith.addf %143, %142 : vector<8x128xf32>
    %145 = arith.divf %143, %144 : vector<8x128xf32>
    %146 = math.tanh %140 : vector<8x128xf32>
    %147 = vector.extract_strided_slice %145 {offsets = [0, 0], sizes = [8, 32], strides = [1, 1]} : vector<8x128xf32> to vector<8x32xf32>
    %148 = vector.extract_strided_slice %145 {offsets = [0, 32], sizes = [8, 32], strides = [1, 1]} : vector<8x128xf32> to vector<8x32xf32>
    %149 = vector.extract_strided_slice %145 {offsets = [0, 96], sizes = [8, 32], strides = [1, 1]} : vector<8x128xf32> to vector<8x32xf32>
    %150 = vector.extract_strided_slice %146 {offsets = [0, 64], sizes = [8, 32], strides = [1, 1]} : vector<8x128xf32> to vector<8x32xf32>
    %151 = arith.mulf %148, %128 : vector<8x32xf32>
    %152 = arith.mulf %147, %150 : vector<8x32xf32>
    %153 = arith.addf %151, %152 : vector<8x32xf32>
    %154 = math.tanh %153 : vector<8x32xf32>
    %155 = arith.mulf %149, %154 : vector<8x32xf32>
    %156 = arith.truncf %155 : vector<8x32xf32> to vector<8x32xbf16>
    %157 = arith.index_cast %135 : i32 to index
    %c0_38 = arith.constant 0 : index
    %158 = vector.load %arg22[%157, %c0_38] : memref<64x32xbf16, #tpu.memory_space<vmem>>, vector<8x32xbf16>
    tpu.vector_store %arg22[%157, %c0_38], %156 {strides = array<i32>} : memref<64x32xbf16, #tpu.memory_space<vmem>>, vector<8x32xbf16>,
    %c6_i32 = arith.constant 6 : i32
    %c8_i32_39 = arith.constant 8 : i32
    %159 = arith.muli %c6_i32, %c8_i32_39 : i32
    %160 = tpu.assume_multiple %159, 8 : i32
    %161 = arith.index_cast %160 : i32 to index
    %c0_40 = arith.constant 0 : index
    %162 = vector.load %arg23[%161, %c0_40] : memref<64x128xf32, #tpu.memory_space<vmem>>, vector<8x128xf32>
    %163 = arith.truncf %155 : vector<8x32xf32> to vector<8x32xbf16>
    %cst_41 = arith.constant dense<0.000000e+00> : vector<8x128xf32>
    %164 = tpu.matmul %163, %7, %cst_41 {dimension_numbers = #tpu.dot_dimension_numbers<[1], [0], [0], [1], [0, 0, 1, 1], [], []>} : vector<8x32xbf16>, vector<32x128xbf16>, vector<8x128xf32> -> vector<8x128xf32>
    %165 = arith.addf %162, %164 : vector<8x128xf32>
    %166 = arith.negf %165 : vector<8x128xf32>
    %167 = math.exp %166 : vector<8x128xf32>
    %cst_42 = arith.constant 1.000000e+00 : f32
    %168 = vector.broadcast %cst_42 : f32 to vector<8x128xf32>
    %169 = arith.addf %168, %167 : vector<8x128xf32>
    %170 = arith.divf %168, %169 : vector<8x128xf32>
    %171 = math.tanh %165 : vector<8x128xf32>
    %172 = vector.extract_strided_slice %170 {offsets = [0, 0], sizes = [8, 32], strides = [1, 1]} : vector<8x128xf32> to vector<8x32xf32>
    %173 = vector.extract_strided_slice %170 {offsets = [0, 32], sizes = [8, 32], strides = [1, 1]} : vector<8x128xf32> to vector<8x32xf32>
    %174 = vector.extract_strided_slice %170 {offsets = [0, 96], sizes = [8, 32], strides = [1, 1]} : vector<8x128xf32> to vector<8x32xf32>
    %175 = vector.extract_strided_slice %171 {offsets = [0, 64], sizes = [8, 32], strides = [1, 1]} : vector<8x128xf32> to vector<8x32xf32>
    %176 = arith.mulf %173, %153 : vector<8x32xf32>
    %177 = arith.mulf %172, %175 : vector<8x32xf32>
    %178 = arith.addf %176, %177 : vector<8x32xf32>
    %179 = math.tanh %178 : vector<8x32xf32>
    %180 = arith.mulf %174, %179 : vector<8x32xf32>
    %181 = arith.truncf %180 : vector<8x32xf32> to vector<8x32xbf16>
    %182 = arith.index_cast %160 : i32 to index
    %c0_43 = arith.constant 0 : index
    %183 = vector.load %arg22[%182, %c0_43] : memref<64x32xbf16, #tpu.memory_space<vmem>>, vector<8x32xbf16>
    tpu.vector_store %arg22[%182, %c0_43], %181 {strides = array<i32>} : memref<64x32xbf16, #tpu.memory_space<vmem>>, vector<8x32xbf16>,
    %c7_i32 = arith.constant 7 : i32
    %c8_i32_44 = arith.constant 8 : i32
    %184 = arith.muli %c7_i32, %c8_i32_44 : i32
    %185 = tpu.assume_multiple %184, 8 : i32
    %186 = arith.index_cast %185 : i32 to index
    %c0_45 = arith.constant 0 : index
    %187 = vector.load %arg23[%186, %c0_45] : memref<64x128xf32, #tpu.memory_space<vmem>>, vector<8x128xf32>
    %188 = arith.truncf %180 : vector<8x32xf32> to vector<8x32xbf16>
    %cst_46 = arith.constant dense<0.000000e+00> : vector<8x128xf32>
    %189 = tpu.matmul %188, %7, %cst_46 {dimension_numbers = #tpu.dot_dimension_numbers<[1], [0], [0], [1], [0, 0, 1, 1], [], []>} : vector<8x32xbf16>, vector<32x128xbf16>, vector<8x128xf32> -> vector<8x128xf32>
    %190 = arith.addf %187, %189 : vector<8x128xf32>
    %191 = arith.negf %190 : vector<8x128xf32>
    %192 = math.exp %191 : vector<8x128xf32>
    %cst_47 = arith.constant 1.000000e+00 : f32
    %193 = vector.broadcast %cst_47 : f32 to vector<8x128xf32>
    %194 = arith.addf %193, %192 : vector<8x128xf32>
    %195 = arith.divf %193, %194 : vector<8x128xf32>
    %196 = math.tanh %190 : vector<8x128xf32>
    %197 = vector.extract_strided_slice %195 {offsets = [0, 0], sizes = [8, 32], strides = [1, 1]} : vector<8x128xf32> to vector<8x32xf32>
    %198 = vector.extract_strided_slice %195 {offsets = [0, 32], sizes = [8, 32], strides = [1, 1]} : vector<8x128xf32> to vector<8x32xf32>
    %199 = vector.extract_strided_slice %195 {offsets = [0, 96], sizes = [8, 32], strides = [1, 1]} : vector<8x128xf32> to vector<8x32xf32>
    %200 = vector.extract_strided_slice %196 {offsets = [0, 64], sizes = [8, 32], strides = [1, 1]} : vector<8x128xf32> to vector<8x32xf32>
    %201 = arith.mulf %198, %178 : vector<8x32xf32>
    %202 = arith.mulf %197, %200 : vector<8x32xf32>
    %203 = arith.addf %201, %202 : vector<8x32xf32>
    %204 = math.tanh %203 : vector<8x32xf32>
    %205 = arith.mulf %199, %204 : vector<8x32xf32>
    %206 = arith.truncf %205 : vector<8x32xf32> to vector<8x32xbf16>
    %207 = arith.index_cast %185 : i32 to index
    %c0_48 = arith.constant 0 : index
    %208 = vector.load %arg22[%207, %c0_48] : memref<64x32xbf16, #tpu.memory_space<vmem>>, vector<8x32xbf16>
    tpu.vector_store %arg22[%207, %c0_48], %206 {strides = array<i32>} : memref<64x32xbf16, #tpu.memory_space<vmem>>, vector<8x32xbf16>,
    %c8_i32_49 = arith.constant 8 : i32
    %c0_50 = arith.constant 0 : index
    %c0_51 = arith.constant 0 : index
    %209 = vector.load %arg22[%c0_50, %c0_51] : memref<64x32xbf16, #tpu.memory_space<vmem>>, vector<64x32xbf16>
    %c0_52 = arith.constant 0 : index
    %c0_53 = arith.constant 0 : index
    %210 = vector.load %arg4[%c0_52, %c0_53] : memref<32x128xbf16, #tpu.memory_space<vmem>>, vector<32x128xbf16>
    %cst_54 = arith.constant dense<0.000000e+00> : vector<64x128xf32>
    %211 = tpu.matmul %209, %210, %cst_54 {dimension_numbers = #tpu.dot_dimension_numbers<[1], [0], [0], [1], [0, 0, 1, 1], [], []>} : vector<64x32xbf16>, vector<32x128xbf16>, vector<64x128xf32> -> vector<64x128xf32>
    %c0_55 = arith.constant 0 : index
    %c0_56 = arith.constant 0 : index
    %212 = vector.load %arg6[%c0_55, %c0_56] : memref<1x128xf32, #tpu.memory_space<vmem>>, vector<1x128xf32>
    %213 = vector.broadcast %212 : vector<1x128xf32> to vector<64x128xf32>
    %214 = arith.addf %211, %213 : vector<64x128xf32>
    %c0_57 = arith.constant 0 : index
    %c0_58 = arith.constant 0 : index
    %215 = vector.load %arg23[%c0_57, %c0_58] : memref<64x128xf32, #tpu.memory_space<vmem>>, vector<64x128xf32>
    tpu.vector_store %arg23[%c0_57, %c0_58], %214 {strides = array<i32>} : memref<64x128xf32, #tpu.memory_space<vmem>>, vector<64x128xf32>,
    %c0_59 = arith.constant 0 : index
    %c0_60 = arith.constant 0 : index
    %216 = vector.load %arg5[%c0_59, %c0_60] : memref<32x128xbf16, #tpu.memory_space<vmem>>, vector<32x128xbf16>
    %cst_61 = arith.constant 0.000000e+00 : f32
    %217 = vector.broadcast %cst_61 : f32 to vector<8x32xf32>
    %c0_i32_62 = arith.constant 0 : i32
    %c8_i32_63 = arith.constant 8 : i32
    %218 = arith.muli %c0_i32_62, %c8_i32_63 : i32
    %219 = tpu.assume_multiple %218, 8 : i32
    %220 = arith.index_cast %219 : i32 to index
    %c0_64 = arith.constant 0 : index
    %221 = vector.load %arg23[%220, %c0_64] : memref<64x128xf32, #tpu.memory_space<vmem>>, vector<8x128xf32>
    %222 = arith.truncf %217 : vector<8x32xf32> to vector<8x32xbf16>
    %cst_65 = arith.constant dense<0.000000e+00> : vector<8x128xf32>
    %223 = tpu.matmul %222, %216, %cst_65 {dimension_numbers = #tpu.dot_dimension_numbers<[1], [0], [0], [1], [0, 0, 1, 1], [], []>} : vector<8x32xbf16>, vector<32x128xbf16>, vector<8x128xf32> -> vector<8x128xf32>
    %224 = arith.addf %221, %223 : vector<8x128xf32>
    %225 = arith.negf %224 : vector<8x128xf32>
    %226 = math.exp %225 : vector<8x128xf32>
    %cst_66 = arith.constant 1.000000e+00 : f32
    %227 = vector.broadcast %cst_66 : f32 to vector<8x128xf32>
    %228 = arith.addf %227, %226 : vector<8x128xf32>
    %229 = arith.divf %227, %228 : vector<8x128xf32>
    %230 = math.tanh %224 : vector<8x128xf32>
    %231 = vector.extract_strided_slice %229 {offsets = [0, 0], sizes = [8, 32], strides = [1, 1]} : vector<8x128xf32> to vector<8x32xf32>
    %232 = vector.extract_strided_slice %229 {offsets = [0, 32], sizes = [8, 32], strides = [1, 1]} : vector<8x128xf32> to vector<8x32xf32>
    %233 = vector.extract_strided_slice %229 {offsets = [0, 96], sizes = [8, 32], strides = [1, 1]} : vector<8x128xf32> to vector<8x32xf32>
    %234 = vector.extract_strided_slice %230 {offsets = [0, 64], sizes = [8, 32], strides = [1, 1]} : vector<8x128xf32> to vector<8x32xf32>
    %235 = arith.mulf %232, %217 : vector<8x32xf32>
    %236 = arith.mulf %231, %234 : vector<8x32xf32>
    %237 = arith.addf %235, %236 : vector<8x32xf32>
    %238 = math.tanh %237 : vector<8x32xf32>
    %239 = arith.mulf %233, %238 : vector<8x32xf32>
    %240 = arith.truncf %239 : vector<8x32xf32> to vector<8x32xbf16>
    %241 = arith.index_cast %219 : i32 to index
    %c0_67 = arith.constant 0 : index
    %242 = vector.load %arg22[%241, %c0_67] : memref<64x32xbf16, #tpu.memory_space<vmem>>, vector<8x32xbf16>
    tpu.vector_store %arg22[%241, %c0_67], %240 {strides = array<i32>} : memref<64x32xbf16, #tpu.memory_space<vmem>>, vector<8x32xbf16>,
    %c1_i32_68 = arith.constant 1 : i32
    %c8_i32_69 = arith.constant 8 : i32
    %243 = arith.muli %c1_i32_68, %c8_i32_69 : i32
    %244 = tpu.assume_multiple %243, 8 : i32
    %245 = arith.index_cast %244 : i32 to index
    %c0_70 = arith.constant 0 : index
    %246 = vector.load %arg23[%245, %c0_70] : memref<64x128xf32, #tpu.memory_space<vmem>>, vector<8x128xf32>
    %247 = arith.truncf %239 : vector<8x32xf32> to vector<8x32xbf16>
    %cst_71 = arith.constant dense<0.000000e+00> : vector<8x128xf32>
    %248 = tpu.matmul %247, %216, %cst_71 {dimension_numbers = #tpu.dot_dimension_numbers<[1], [0], [0], [1], [0, 0, 1, 1], [], []>} : vector<8x32xbf16>, vector<32x128xbf16>, vector<8x128xf32> -> vector<8x128xf32>
    %249 = arith.addf %246, %248 : vector<8x128xf32>
    %250 = arith.negf %249 : vector<8x128xf32>
    %251 = math.exp %250 : vector<8x128xf32>
    %cst_72 = arith.constant 1.000000e+00 : f32
    %252 = vector.broadcast %cst_72 : f32 to vector<8x128xf32>
    %253 = arith.addf %252, %251 : vector<8x128xf32>
    %254 = arith.divf %252, %253 : vector<8x128xf32>
    %255 = math.tanh %249 : vector<8x128xf32>
    %256 = vector.extract_strided_slice %254 {offsets = [0, 0], sizes = [8, 32], strides = [1, 1]} : vector<8x128xf32> to vector<8x32xf32>
    %257 = vector.extract_strided_slice %254 {offsets = [0, 32], sizes = [8, 32], strides = [1, 1]} : vector<8x128xf32> to vector<8x32xf32>
    %258 = vector.extract_strided_slice %254 {offsets = [0, 96], sizes = [8, 32], strides = [1, 1]} : vector<8x128xf32> to vector<8x32xf32>
    %259 = vector.extract_strided_slice %255 {offsets = [0, 64], sizes = [8, 32], strides = [1, 1]} : vector<8x128xf32> to vector<8x32xf32>
    %260 = arith.mulf %257, %237 : vector<8x32xf32>
    %261 = arith.mulf %256, %259 : vector<8x32xf32>
    %262 = arith.addf %260, %261 : vector<8x32xf32>
    %263 = math.tanh %262 : vector<8x32xf32>
    %264 = arith.mulf %258, %263 : vector<8x32xf32>
    %265 = arith.truncf %264 : vector<8x32xf32> to vector<8x32xbf16>
    %266 = arith.index_cast %244 : i32 to index
    %c0_73 = arith.constant 0 : index
    %267 = vector.load %arg22[%266, %c0_73] : memref<64x32xbf16, #tpu.memory_space<vmem>>, vector<8x32xbf16>
    tpu.vector_store %arg22[%266, %c0_73], %265 {strides = array<i32>} : memref<64x32xbf16, #tpu.memory_space<vmem>>, vector<8x32xbf16>,
    %c2_i32_74 = arith.constant 2 : i32
    %c8_i32_75 = arith.constant 8 : i32
    %268 = arith.muli %c2_i32_74, %c8_i32_75 : i32
    %269 = tpu.assume_multiple %268, 8 : i32
    %270 = arith.index_cast %269 : i32 to index
    %c0_76 = arith.constant 0 : index
    %271 = vector.load %arg23[%270, %c0_76] : memref<64x128xf32, #tpu.memory_space<vmem>>, vector<8x128xf32>
    %272 = arith.truncf %264 : vector<8x32xf32> to vector<8x32xbf16>
    %cst_77 = arith.constant dense<0.000000e+00> : vector<8x128xf32>
    %273 = tpu.matmul %272, %216, %cst_77 {dimension_numbers = #tpu.dot_dimension_numbers<[1], [0], [0], [1], [0, 0, 1, 1], [], []>} : vector<8x32xbf16>, vector<32x128xbf16>, vector<8x128xf32> -> vector<8x128xf32>
    %274 = arith.addf %271, %273 : vector<8x128xf32>
    %275 = arith.negf %274 : vector<8x128xf32>
    %276 = math.exp %275 : vector<8x128xf32>
    %cst_78 = arith.constant 1.000000e+00 : f32
    %277 = vector.broadcast %cst_78 : f32 to vector<8x128xf32>
    %278 = arith.addf %277, %276 : vector<8x128xf32>
    %279 = arith.divf %277, %278 : vector<8x128xf32>
    %280 = math.tanh %274 : vector<8x128xf32>
    %281 = vector.extract_strided_slice %279 {offsets = [0, 0], sizes = [8, 32], strides = [1, 1]} : vector<8x128xf32> to vector<8x32xf32>
    %282 = vector.extract_strided_slice %279 {offsets = [0, 32], sizes = [8, 32], strides = [1, 1]} : vector<8x128xf32> to vector<8x32xf32>
    %283 = vector.extract_strided_slice %279 {offsets = [0, 96], sizes = [8, 32], strides = [1, 1]} : vector<8x128xf32> to vector<8x32xf32>
    %284 = vector.extract_strided_slice %280 {offsets = [0, 64], sizes = [8, 32], strides = [1, 1]} : vector<8x128xf32> to vector<8x32xf32>
    %285 = arith.mulf %282, %262 : vector<8x32xf32>
    %286 = arith.mulf %281, %284 : vector<8x32xf32>
    %287 = arith.addf %285, %286 : vector<8x32xf32>
    %288 = math.tanh %287 : vector<8x32xf32>
    %289 = arith.mulf %283, %288 : vector<8x32xf32>
    %290 = arith.truncf %289 : vector<8x32xf32> to vector<8x32xbf16>
    %291 = arith.index_cast %269 : i32 to index
    %c0_79 = arith.constant 0 : index
    %292 = vector.load %arg22[%291, %c0_79] : memref<64x32xbf16, #tpu.memory_space<vmem>>, vector<8x32xbf16>
    tpu.vector_store %arg22[%291, %c0_79], %290 {strides = array<i32>} : memref<64x32xbf16, #tpu.memory_space<vmem>>, vector<8x32xbf16>,
    %c3_i32_80 = arith.constant 3 : i32
    %c8_i32_81 = arith.constant 8 : i32
    %293 = arith.muli %c3_i32_80, %c8_i32_81 : i32
    %294 = tpu.assume_multiple %293, 8 : i32
    %295 = arith.index_cast %294 : i32 to index
    %c0_82 = arith.constant 0 : index
    %296 = vector.load %arg23[%295, %c0_82] : memref<64x128xf32, #tpu.memory_space<vmem>>, vector<8x128xf32>
    %297 = arith.truncf %289 : vector<8x32xf32> to vector<8x32xbf16>
    %cst_83 = arith.constant dense<0.000000e+00> : vector<8x128xf32>
    %298 = tpu.matmul %297, %216, %cst_83 {dimension_numbers = #tpu.dot_dimension_numbers<[1], [0], [0], [1], [0, 0, 1, 1], [], []>} : vector<8x32xbf16>, vector<32x128xbf16>, vector<8x128xf32> -> vector<8x128xf32>
    %299 = arith.addf %296, %298 : vector<8x128xf32>
    %300 = arith.negf %299 : vector<8x128xf32>
    %301 = math.exp %300 : vector<8x128xf32>
    %cst_84 = arith.constant 1.000000e+00 : f32
    %302 = vector.broadcast %cst_84 : f32 to vector<8x128xf32>
    %303 = arith.addf %302, %301 : vector<8x128xf32>
    %304 = arith.divf %302, %303 : vector<8x128xf32>
    %305 = math.tanh %299 : vector<8x128xf32>
    %306 = vector.extract_strided_slice %304 {offsets = [0, 0], sizes = [8, 32], strides = [1, 1]} : vector<8x128xf32> to vector<8x32xf32>
    %307 = vector.extract_strided_slice %304 {offsets = [0, 32], sizes = [8, 32], strides = [1, 1]} : vector<8x128xf32> to vector<8x32xf32>
    %308 = vector.extract_strided_slice %304 {offsets = [0, 96], sizes = [8, 32], strides = [1, 1]} : vector<8x128xf32> to vector<8x32xf32>
    %309 = vector.extract_strided_slice %305 {offsets = [0, 64], sizes = [8, 32], strides = [1, 1]} : vector<8x128xf32> to vector<8x32xf32>
    %310 = arith.mulf %307, %287 : vector<8x32xf32>
    %311 = arith.mulf %306, %309 : vector<8x32xf32>
    %312 = arith.addf %310, %311 : vector<8x32xf32>
    %313 = math.tanh %312 : vector<8x32xf32>
    %314 = arith.mulf %308, %313 : vector<8x32xf32>
    %315 = arith.truncf %314 : vector<8x32xf32> to vector<8x32xbf16>
    %316 = arith.index_cast %294 : i32 to index
    %c0_85 = arith.constant 0 : index
    %317 = vector.load %arg22[%316, %c0_85] : memref<64x32xbf16, #tpu.memory_space<vmem>>, vector<8x32xbf16>
    tpu.vector_store %arg22[%316, %c0_85], %315 {strides = array<i32>} : memref<64x32xbf16, #tpu.memory_space<vmem>>, vector<8x32xbf16>,
    %c4_i32_86 = arith.constant 4 : i32
    %c8_i32_87 = arith.constant 8 : i32
    %318 = arith.muli %c4_i32_86, %c8_i32_87 : i32
    %319 = tpu.assume_multiple %318, 8 : i32
    %320 = arith.index_cast %319 : i32 to index
    %c0_88 = arith.constant 0 : index
    %321 = vector.load %arg23[%320, %c0_88] : memref<64x128xf32, #tpu.memory_space<vmem>>, vector<8x128xf32>
    %322 = arith.truncf %314 : vector<8x32xf32> to vector<8x32xbf16>
    %cst_89 = arith.constant dense<0.000000e+00> : vector<8x128xf32>
    %323 = tpu.matmul %322, %216, %cst_89 {dimension_numbers = #tpu.dot_dimension_numbers<[1], [0], [0], [1], [0, 0, 1, 1], [], []>} : vector<8x32xbf16>, vector<32x128xbf16>, vector<8x128xf32> -> vector<8x128xf32>
    %324 = arith.addf %321, %323 : vector<8x128xf32>
    %325 = arith.negf %324 : vector<8x128xf32>
    %326 = math.exp %325 : vector<8x128xf32>
    %cst_90 = arith.constant 1.000000e+00 : f32
    %327 = vector.broadcast %cst_90 : f32 to vector<8x128xf32>
    %328 = arith.addf %327, %326 : vector<8x128xf32>
    %329 = arith.divf %327, %328 : vector<8x128xf32>
    %330 = math.tanh %324 : vector<8x128xf32>
    %331 = vector.extract_strided_slice %329 {offsets = [0, 0], sizes = [8, 32], strides = [1, 1]} : vector<8x128xf32> to vector<8x32xf32>
    %332 = vector.extract_strided_slice %329 {offsets = [0, 32], sizes = [8, 32], strides = [1, 1]} : vector<8x128xf32> to vector<8x32xf32>
    %333 = vector.extract_strided_slice %329 {offsets = [0, 96], sizes = [8, 32], strides = [1, 1]} : vector<8x128xf32> to vector<8x32xf32>
    %334 = vector.extract_strided_slice %330 {offsets = [0, 64], sizes = [8, 32], strides = [1, 1]} : vector<8x128xf32> to vector<8x32xf32>
    %335 = arith.mulf %332, %312 : vector<8x32xf32>
    %336 = arith.mulf %331, %334 : vector<8x32xf32>
    %337 = arith.addf %335, %336 : vector<8x32xf32>
    %338 = math.tanh %337 : vector<8x32xf32>
    %339 = arith.mulf %333, %338 : vector<8x32xf32>
    %340 = arith.truncf %339 : vector<8x32xf32> to vector<8x32xbf16>
    %341 = arith.index_cast %319 : i32 to index
    %c0_91 = arith.constant 0 : index
    %342 = vector.load %arg22[%341, %c0_91] : memref<64x32xbf16, #tpu.memory_space<vmem>>, vector<8x32xbf16>
    tpu.vector_store %arg22[%341, %c0_91], %340 {strides = array<i32>} : memref<64x32xbf16, #tpu.memory_space<vmem>>, vector<8x32xbf16>,
    %c5_i32_92 = arith.constant 5 : i32
    %c8_i32_93 = arith.constant 8 : i32
    %343 = arith.muli %c5_i32_92, %c8_i32_93 : i32
    %344 = tpu.assume_multiple %343, 8 : i32
    %345 = arith.index_cast %344 : i32 to index
    %c0_94 = arith.constant 0 : index
    %346 = vector.load %arg23[%345, %c0_94] : memref<64x128xf32, #tpu.memory_space<vmem>>, vector<8x128xf32>
    %347 = arith.truncf %339 : vector<8x32xf32> to vector<8x32xbf16>
    %cst_95 = arith.constant dense<0.000000e+00> : vector<8x128xf32>
    %348 = tpu.matmul %347, %216, %cst_95 {dimension_numbers = #tpu.dot_dimension_numbers<[1], [0], [0], [1], [0, 0, 1, 1], [], []>} : vector<8x32xbf16>, vector<32x128xbf16>, vector<8x128xf32> -> vector<8x128xf32>
    %349 = arith.addf %346, %348 : vector<8x128xf32>
    %350 = arith.negf %349 : vector<8x128xf32>
    %351 = math.exp %350 : vector<8x128xf32>
    %cst_96 = arith.constant 1.000000e+00 : f32
    %352 = vector.broadcast %cst_96 : f32 to vector<8x128xf32>
    %353 = arith.addf %352, %351 : vector<8x128xf32>
    %354 = arith.divf %352, %353 : vector<8x128xf32>
    %355 = math.tanh %349 : vector<8x128xf32>
    %356 = vector.extract_strided_slice %354 {offsets = [0, 0], sizes = [8, 32], strides = [1, 1]} : vector<8x128xf32> to vector<8x32xf32>
    %357 = vector.extract_strided_slice %354 {offsets = [0, 32], sizes = [8, 32], strides = [1, 1]} : vector<8x128xf32> to vector<8x32xf32>
    %358 = vector.extract_strided_slice %354 {offsets = [0, 96], sizes = [8, 32], strides = [1, 1]} : vector<8x128xf32> to vector<8x32xf32>
    %359 = vector.extract_strided_slice %355 {offsets = [0, 64], sizes = [8, 32], strides = [1, 1]} : vector<8x128xf32> to vector<8x32xf32>
    %360 = arith.mulf %357, %337 : vector<8x32xf32>
    %361 = arith.mulf %356, %359 : vector<8x32xf32>
    %362 = arith.addf %360, %361 : vector<8x32xf32>
    %363 = math.tanh %362 : vector<8x32xf32>
    %364 = arith.mulf %358, %363 : vector<8x32xf32>
    %365 = arith.truncf %364 : vector<8x32xf32> to vector<8x32xbf16>
    %366 = arith.index_cast %344 : i32 to index
    %c0_97 = arith.constant 0 : index
    %367 = vector.load %arg22[%366, %c0_97] : memref<64x32xbf16, #tpu.memory_space<vmem>>, vector<8x32xbf16>
    tpu.vector_store %arg22[%366, %c0_97], %365 {strides = array<i32>} : memref<64x32xbf16, #tpu.memory_space<vmem>>, vector<8x32xbf16>,
    %c6_i32_98 = arith.constant 6 : i32
    %c8_i32_99 = arith.constant 8 : i32
    %368 = arith.muli %c6_i32_98, %c8_i32_99 : i32
    %369 = tpu.assume_multiple %368, 8 : i32
    %370 = arith.index_cast %369 : i32 to index
    %c0_100 = arith.constant 0 : index
    %371 = vector.load %arg23[%370, %c0_100] : memref<64x128xf32, #tpu.memory_space<vmem>>, vector<8x128xf32>
    %372 = arith.truncf %364 : vector<8x32xf32> to vector<8x32xbf16>
    %cst_101 = arith.constant dense<0.000000e+00> : vector<8x128xf32>
    %373 = tpu.matmul %372, %216, %cst_101 {dimension_numbers = #tpu.dot_dimension_numbers<[1], [0], [0], [1], [0, 0, 1, 1], [], []>} : vector<8x32xbf16>, vector<32x128xbf16>, vector<8x128xf32> -> vector<8x128xf32>
    %374 = arith.addf %371, %373 : vector<8x128xf32>
    %375 = arith.negf %374 : vector<8x128xf32>
    %376 = math.exp %375 : vector<8x128xf32>
    %cst_102 = arith.constant 1.000000e+00 : f32
    %377 = vector.broadcast %cst_102 : f32 to vector<8x128xf32>
    %378 = arith.addf %377, %376 : vector<8x128xf32>
    %379 = arith.divf %377, %378 : vector<8x128xf32>
    %380 = math.tanh %374 : vector<8x128xf32>
    %381 = vector.extract_strided_slice %379 {offsets = [0, 0], sizes = [8, 32], strides = [1, 1]} : vector<8x128xf32> to vector<8x32xf32>
    %382 = vector.extract_strided_slice %379 {offsets = [0, 32], sizes = [8, 32], strides = [1, 1]} : vector<8x128xf32> to vector<8x32xf32>
    %383 = vector.extract_strided_slice %379 {offsets = [0, 96], sizes = [8, 32], strides = [1, 1]} : vector<8x128xf32> to vector<8x32xf32>
    %384 = vector.extract_strided_slice %380 {offsets = [0, 64], sizes = [8, 32], strides = [1, 1]} : vector<8x128xf32> to vector<8x32xf32>
    %385 = arith.mulf %382, %362 : vector<8x32xf32>
    %386 = arith.mulf %381, %384 : vector<8x32xf32>
    %387 = arith.addf %385, %386 : vector<8x32xf32>
    %388 = math.tanh %387 : vector<8x32xf32>
    %389 = arith.mulf %383, %388 : vector<8x32xf32>
    %390 = arith.truncf %389 : vector<8x32xf32> to vector<8x32xbf16>
    %391 = arith.index_cast %369 : i32 to index
    %c0_103 = arith.constant 0 : index
    %392 = vector.load %arg22[%391, %c0_103] : memref<64x32xbf16, #tpu.memory_space<vmem>>, vector<8x32xbf16>
    tpu.vector_store %arg22[%391, %c0_103], %390 {strides = array<i32>} : memref<64x32xbf16, #tpu.memory_space<vmem>>, vector<8x32xbf16>,
    %c7_i32_104 = arith.constant 7 : i32
    %c8_i32_105 = arith.constant 8 : i32
    %393 = arith.muli %c7_i32_104, %c8_i32_105 : i32
    %394 = tpu.assume_multiple %393, 8 : i32
    %395 = arith.index_cast %394 : i32 to index
    %c0_106 = arith.constant 0 : index
    %396 = vector.load %arg23[%395, %c0_106] : memref<64x128xf32, #tpu.memory_space<vmem>>, vector<8x128xf32>
    %397 = arith.truncf %389 : vector<8x32xf32> to vector<8x32xbf16>
    %cst_107 = arith.constant dense<0.000000e+00> : vector<8x128xf32>
    %398 = tpu.matmul %397, %216, %cst_107 {dimension_numbers = #tpu.dot_dimension_numbers<[1], [0], [0], [1], [0, 0, 1, 1], [], []>} : vector<8x32xbf16>, vector<32x128xbf16>, vector<8x128xf32> -> vector<8x128xf32>
    %399 = arith.addf %396, %398 : vector<8x128xf32>
    %400 = arith.negf %399 : vector<8x128xf32>
    %401 = math.exp %400 : vector<8x128xf32>
    %cst_108 = arith.constant 1.000000e+00 : f32
    %402 = vector.broadcast %cst_108 : f32 to vector<8x128xf32>
    %403 = arith.addf %402, %401 : vector<8x128xf32>
    %404 = arith.divf %402, %403 : vector<8x128xf32>
    %405 = math.tanh %399 : vector<8x128xf32>
    %406 = vector.extract_strided_slice %404 {offsets = [0, 0], sizes = [8, 32], strides = [1, 1]} : vector<8x128xf32> to vector<8x32xf32>
    %407 = vector.extract_strided_slice %404 {offsets = [0, 32], sizes = [8, 32], strides = [1, 1]} : vector<8x128xf32> to vector<8x32xf32>
    %408 = vector.extract_strided_slice %404 {offsets = [0, 96], sizes = [8, 32], strides = [1, 1]} : vector<8x128xf32> to vector<8x32xf32>
    %409 = vector.extract_strided_slice %405 {offsets = [0, 64], sizes = [8, 32], strides = [1, 1]} : vector<8x128xf32> to vector<8x32xf32>
    %410 = arith.mulf %407, %387 : vector<8x32xf32>
    %411 = arith.mulf %406, %409 : vector<8x32xf32>
    %412 = arith.addf %410, %411 : vector<8x32xf32>
    %413 = math.tanh %412 : vector<8x32xf32>
    %414 = arith.mulf %408, %413 : vector<8x32xf32>
    %415 = arith.truncf %414 : vector<8x32xf32> to vector<8x32xbf16>
    %416 = arith.index_cast %394 : i32 to index
    %c0_109 = arith.constant 0 : index
    %417 = vector.load %arg22[%416, %c0_109] : memref<64x32xbf16, #tpu.memory_space<vmem>>, vector<8x32xbf16>
    tpu.vector_store %arg22[%416, %c0_109], %415 {strides = array<i32>} : memref<64x32xbf16, #tpu.memory_space<vmem>>, vector<8x32xbf16>,
    %c8_i32_110 = arith.constant 8 : i32
    %c0_111 = arith.constant 0 : index
    %c0_112 = arith.constant 0 : index
    %418 = vector.load %arg22[%c0_111, %c0_112] : memref<64x32xbf16, #tpu.memory_space<vmem>>, vector<64x32xbf16>
    %419 = vector.extract_strided_slice %418 {offsets = [56, 0], sizes = [8, 32], strides = [1, 1]} : vector<64x32xbf16> to vector<8x32xbf16>
    %c0_113 = arith.constant 0 : index
    %c0_114 = arith.constant 0 : index
    %420 = vector.load %arg7[%c0_113, %c0_114] : memref<32x32xbf16, #tpu.memory_space<vmem>>, vector<32x32xbf16>
    %cst_115 = arith.constant dense<0.000000e+00> : vector<8x32xf32>
    %421 = tpu.matmul %419, %420, %cst_115 {dimension_numbers = #tpu.dot_dimension_numbers<[1], [0], [0], [1], [0, 0, 1, 1], [], []>} : vector<8x32xbf16>, vector<32x32xbf16>, vector<8x32xf32> -> vector<8x32xf32>
    %c0_116 = arith.constant 0 : index
    %c0_117 = arith.constant 0 : index
    %422 = vector.load %arg10[%c0_116, %c0_117] : memref<1x32xf32, #tpu.memory_space<vmem>>, vector<1x32xf32>
    %423 = vector.broadcast %422 : vector<1x32xf32> to vector<8x32xf32>
    %424 = arith.addf %421, %423 : vector<8x32xf32>
    %cst_118 = arith.constant 0.353553385 : f32
    %425 = vector.broadcast %cst_118 : f32 to vector<8x32xf32>
    %426 = arith.mulf %424, %425 : vector<8x32xf32>
    %c0_119 = arith.constant 0 : index
    %c0_120 = arith.constant 0 : index
    %427 = vector.load %arg8[%c0_119, %c0_120] : memref<32x32xbf16, #tpu.memory_space<vmem>>, vector<32x32xbf16>
    %cst_121 = arith.constant dense<0.000000e+00> : vector<64x32xf32>
    %428 = tpu.matmul %418, %427, %cst_121 {dimension_numbers = #tpu.dot_dimension_numbers<[1], [0], [0], [1], [0, 0, 1, 1], [], []>} : vector<64x32xbf16>, vector<32x32xbf16>, vector<64x32xf32> -> vector<64x32xf32>
    %c0_122 = arith.constant 0 : index
    %c0_123 = arith.constant 0 : index
    %429 = vector.load %arg11[%c0_122, %c0_123] : memref<1x32xf32, #tpu.memory_space<vmem>>, vector<1x32xf32>
    %430 = vector.broadcast %429 : vector<1x32xf32> to vector<64x32xf32>
    %431 = arith.addf %428, %430 : vector<64x32xf32>
    %c0_124 = arith.constant 0 : index
    %c0_125 = arith.constant 0 : index
    %432 = vector.load %arg9[%c0_124, %c0_125] : memref<32x32xbf16, #tpu.memory_space<vmem>>, vector<32x32xbf16>
    %cst_126 = arith.constant dense<0.000000e+00> : vector<64x32xf32>
    %433 = tpu.matmul %418, %432, %cst_126 {dimension_numbers = #tpu.dot_dimension_numbers<[1], [0], [0], [1], [0, 0, 1, 1], [], []>} : vector<64x32xbf16>, vector<32x32xbf16>, vector<64x32xf32> -> vector<64x32xf32>
    %c0_127 = arith.constant 0 : index
    %c0_128 = arith.constant 0 : index
    %434 = vector.load %arg12[%c0_127, %c0_128] : memref<1x32xf32, #tpu.memory_space<vmem>>, vector<1x32xf32>
    %435 = vector.broadcast %434 : vector<1x32xf32> to vector<64x32xf32>
    %436 = arith.addf %433, %435 : vector<64x32xf32>
    %437 = vector.shape_cast %431 : vector<64x32xf32> to vector<8x8x32xf32>
    %438 = vector.shape_cast %426 : vector<8x32xf32> to vector<1x8x32xf32>
    %439 = vector.broadcast %438 : vector<1x8x32xf32> to vector<8x8x32xf32>
    %440 = arith.mulf %437, %439 : vector<8x8x32xf32>
    %441 = vector.shape_cast %440 : vector<8x8x32xf32> to vector<64x32xf32>
    %c0_129 = arith.constant 0 : index
    %c0_130 = arith.constant 0 : index
    %442 = vector.load %arg19[%c0_129, %c0_130] : memref<32x4xf32, #tpu.memory_space<vmem>>, vector<32x4xf32>
    %cst_131 = arith.constant dense<0.000000e+00> : vector<64x4xf32>
    %443 = tpu.matmul %441, %442, %cst_131 {dimension_numbers = #tpu.dot_dimension_numbers<[1], [0], [0], [1], [0, 0, 1, 1], [], []>} : vector<64x32xf32>, vector<32x4xf32>, vector<64x4xf32> -> vector<64x4xf32>
    %444 = vector.shape_cast %443 : vector<64x4xf32> to vector<8x8x4xf32>
    %cst_132 = arith.constant dense<0xFF800000> : vector<8x4xf32>
    %445 = vector.multi_reduction <maximumf>, %444, %cst_132 [0] : vector<8x8x4xf32> to vector<8x4xf32>
    %446 = vector.shape_cast %445 : vector<8x4xf32> to vector<1x8x4xf32>
    %447 = vector.broadcast %446 : vector<1x8x4xf32> to vector<8x8x4xf32>
    %448 = arith.subf %444, %447 : vector<8x8x4xf32>
    %449 = math.exp %448 : vector<8x8x4xf32>
    %cst_133 = arith.constant dense<0.000000e+00> : vector<8x4xf32>
    %450 = vector.multi_reduction <add>, %449, %cst_133 [0] : vector<8x8x4xf32> to vector<8x4xf32>
    %451 = vector.shape_cast %450 : vector<8x4xf32> to vector<1x8x4xf32>
    %452 = tpu.reciprocal %451 {approx = true} : vector<1x8x4xf32> -> vector<1x8x4xf32>
    %453 = vector.broadcast %452 : vector<1x8x4xf32> to vector<8x8x4xf32>
    %454 = arith.mulf %449, %453 : vector<8x8x4xf32>
    %455 = vector.shape_cast %454 : vector<8x8x4xf32> to vector<64x4xf32>
    %c0_134 = arith.constant 0 : index
    %c0_135 = arith.constant 0 : index
    %456 = vector.load %arg20[%c0_134, %c0_135] : memref<4x32xf32, #tpu.memory_space<vmem>>, vector<4x32xf32>
    %cst_136 = arith.constant dense<0.000000e+00> : vector<64x32xf32>
    %457 = tpu.matmul %455, %456, %cst_136 {dimension_numbers = #tpu.dot_dimension_numbers<[1], [0], [0], [1], [0, 0, 1, 1], [], []>} : vector<64x4xf32>, vector<4x32xf32>, vector<64x32xf32> -> vector<64x32xf32>
    %458 = arith.mulf %457, %436 : vector<64x32xf32>
    %459 = vector.shape_cast %458 : vector<64x32xf32> to vector<8x8x32xf32>
    %cst_137 = arith.constant dense<0.000000e+00> : vector<8x32xf32>
    %460 = vector.multi_reduction <add>, %459, %cst_137 [0] : vector<8x8x32xf32> to vector<8x32xf32>
    %461 = arith.truncf %460 : vector<8x32xf32> to vector<8x32xbf16>
    %c0_138 = arith.constant 0 : index
    %c0_139 = arith.constant 0 : index
    %462 = vector.load %arg13[%c0_138, %c0_139] : memref<32x32xbf16, #tpu.memory_space<vmem>>, vector<32x32xbf16>
    %cst_140 = arith.constant dense<0.000000e+00> : vector<8x32xf32>
    %463 = tpu.matmul %461, %462, %cst_140 {dimension_numbers = #tpu.dot_dimension_numbers<[1], [0], [0], [1], [0, 0, 1, 1], [], []>} : vector<8x32xbf16>, vector<32x32xbf16>, vector<8x32xf32> -> vector<8x32xf32>
    %c0_141 = arith.constant 0 : index
    %c0_142 = arith.constant 0 : index
    %464 = vector.load %arg14[%c0_141, %c0_142] : memref<1x32xf32, #tpu.memory_space<vmem>>, vector<1x32xf32>
    %465 = vector.broadcast %464 : vector<1x32xf32> to vector<8x32xf32>
    %466 = arith.addf %463, %465 : vector<8x32xf32>
    %467 = arith.truncf %466 : vector<8x32xf32> to vector<8x32xbf16>
    %c0_143 = arith.constant 0 : index
    %c0_144 = arith.constant 0 : index
    %468 = vector.load %arg15[%c0_143, %c0_144] : memref<32x16xbf16, #tpu.memory_space<vmem>>, vector<32x16xbf16>
    %cst_145 = arith.constant dense<0.000000e+00> : vector<8x16xf32>
    %469 = tpu.matmul %467, %468, %cst_145 {dimension_numbers = #tpu.dot_dimension_numbers<[1], [0], [0], [1], [0, 0, 1, 1], [], []>} : vector<8x32xbf16>, vector<32x16xbf16>, vector<8x16xf32> -> vector<8x16xf32>
    %c0_146 = arith.constant 0 : index
    %c0_147 = arith.constant 0 : index
    %470 = vector.load %arg16[%c0_146, %c0_147] : memref<1x16xf32, #tpu.memory_space<vmem>>, vector<1x16xf32>
    %471 = vector.broadcast %470 : vector<1x16xf32> to vector<8x16xf32>
    %472 = arith.addf %469, %471 : vector<8x16xf32>
    %cst_148 = arith.constant 0.000000e+00 : f32
    %473 = vector.broadcast %cst_148 : f32 to vector<8x16xf32>
    %474 = arith.maximumf %472, %473 : vector<8x16xf32>
    %475 = arith.truncf %474 : vector<8x16xf32> to vector<8x16xbf16>
    %c0_149 = arith.constant 0 : index
    %c0_150 = arith.constant 0 : index
    %476 = vector.load %arg17[%c0_149, %c0_150] : memref<16x3xbf16, #tpu.memory_space<vmem>>, vector<16x3xbf16>
    %cst_151 = arith.constant dense<0.000000e+00> : vector<8x3xf32>
    %477 = tpu.matmul %475, %476, %cst_151 {dimension_numbers = #tpu.dot_dimension_numbers<[1], [0], [0], [1], [0, 0, 1, 1], [], []>} : vector<8x16xbf16>, vector<16x3xbf16>, vector<8x3xf32> -> vector<8x3xf32>
    %c0_152 = arith.constant 0 : index
    %c0_153 = arith.constant 0 : index
    %478 = vector.load %arg18[%c0_152, %c0_153] : memref<1x3xf32, #tpu.memory_space<vmem>>, vector<1x3xf32>
    %479 = vector.broadcast %478 : vector<1x3xf32> to vector<8x3xf32>
    %480 = arith.addf %477, %479 : vector<8x3xf32>
    %c0_154 = arith.constant 0 : index
    %c0_155 = arith.constant 0 : index
    %481 = vector.load %arg21[%c0_154, %c0_155] : memref<8x3xf32, #tpu.memory_space<vmem>>, vector<8x3xf32>
    tpu.vector_store %arg21[%c0_154, %c0_155], %480 {strides = array<i32>} : memref<8x3xf32, #tpu.memory_space<vmem>>, vector<8x3xf32>,
    return
  }
}

</mosaic_0001>

<llo_original>
// kernel: _lambda_.1
$region0: #{_lambda_.1}
  #allocation0 [shape = 'u32[]', space=smem, size = 0x4, offset = 0x4, fixed_abs, tag = 'smem constant byte address 0x4 - core index']
  #allocation1 [shape = 'u32[72,128]{1,0:T(1,128)}', space=vmem, size = 0x9000, scoped, tag = 'internal scratch']
  #allocation2 [shape = 'bf16[64,32]{1,0:T(8,128)(2,1)}', space=vmem, size = 0x4000, scoped, tag = 'scratch operand']
  #allocation3 [shape = 'f32[64,128]{1,0:T(8,128)}', space=vmem, size = 0x8000, scoped, tag = 'scratch operand']
  %s0 = inlined_call_operand.vmem [shape: bf16[64,8], index: 0, kind: input, shape index: {}]
  %s1 = inlined_call_operand.hbm [shape: bf16[8,128], index: 1, kind: input, shape index: {}]
  %s2 = inlined_call_operand.hbm [shape: bf16[32,128], index: 2, kind: input, shape index: {}]
  %s3 = inlined_call_operand.hbm [shape: f32[1,128], index: 3, kind: input, shape index: {}]
  %s4 = inlined_call_operand.hbm [shape: bf16[32,128], index: 4, kind: input, shape index: {}]
  %s5 = inlined_call_operand.hbm [shape: bf16[32,128], index: 5, kind: input, shape index: {}]
  %s6 = inlined_call_operand.hbm [shape: f32[1,128], index: 6, kind: input, shape index: {}]
  %s7 = inlined_call_operand.hbm [shape: bf16[32,32], index: 7, kind: input, shape index: {}]
  %s8 = inlined_call_operand.hbm [shape: bf16[32,32], index: 8, kind: input, shape index: {}]
  %s9 = inlined_call_operand.vmem [shape: bf16[32,32], index: 9, kind: input, shape index: {}]
  %s10 = inlined_call_operand.hbm [shape: f32[1,32], index: 10, kind: input, shape index: {}]
  %s11 = inlined_call_operand.hbm [shape: f32[1,32], index: 11, kind: input, shape index: {}]
  %s12 = inlined_call_operand.vmem [shape: f32[1,32], index: 12, kind: input, shape index: {}]
  %s13 = inlined_call_operand.vmem [shape: bf16[32,32], index: 13, kind: input, shape index: {}]
  %s14 = inlined_call_operand.vmem [shape: f32[1,32], index: 14, kind: input, shape index: {}]
  %s15 = inlined_call_operand.vmem [shape: bf16[32,16], index: 15, kind: input, shape index: {}]
  %s16 = inlined_call_operand.vmem [shape: f32[1,16], index: 16, kind: input, shape index: {}]
  %s17 = inlined_call_operand.vmem [shape: bf16[16,3], index: 17, kind: input, shape index: {}]
  %s18 = inlined_call_operand.vmem [shape: f32[1,3], index: 18, kind: input, shape index: {}]
  %s19 = inlined_call_operand.vmem [shape: f32[32,4], index: 19, kind: input, shape index: {}]
  %s20 = inlined_call_operand.hbm [shape: f32[4,32], index: 20, kind: input, shape index: {}]
  %s21 = inlined_call_operand.vmem [shape: f32[8,3], index: 21, kind: output, shape index: {}]
  %s22 = sld [smem:[#allocation0]]
  $region138: #{_lambda_.1} parent=0
    _
  %s24 = ssub.s32 1, %s22
  %s25 = scalar_select 0, %s24, %s22
  $region1: #{_lambda_.1} parent=0
    #allocation4 [shape = 'u8[2048]{0}', space=vmem, size = 0x800, scoped, tag = 'input window, operand 1, single buffered']
    #allocation5 [shape = 's32[1]{0}', space=sflag, size = 0x4, scoped, tag = 'scoped memory for _lambda_.1']
    #allocation6 [shape = 'u8[8192]{0}', space=vmem, size = 0x2000, scoped, tag = 'input window, operand 2, single buffered']
    #allocation7 [shape = 's32[1]{0}', space=sflag, size = 0x4, scoped, tag = 'scoped memory for _lambda_.1']
    #allocation8 [shape = 'u8[512]{0}', space=vmem, size = 0x400, scoped, tag = 'input window, operand 3, single buffered']
    #allocation9 [shape = 'u8[8192]{0}', space=vmem, size = 0x2000, scoped, tag = 'input window, operand 4, single buffered']
    #allocation10 [shape = 's32[1]{0}', space=sflag, size = 0x4, scoped, tag = 'scoped memory for _lambda_.1']
    #allocation11 [shape = 'u8[8192]{0}', space=vmem, size = 0x2000, scoped, tag = 'input window, operand 5, single buffered']
    #allocation12 [shape = 'u8[512]{0}', space=vmem, size = 0x400, scoped, tag = 'input window, operand 6, single buffered']
    #allocation13 [shape = 's32[1]{0}', space=sflag, size = 0x4, scoped, tag = 'scoped memory for _lambda_.1']
    #allocation14 [shape = 'u8[8192]{0}', space=vmem, size = 0x2000, scoped, tag = 'input window, operand 7, single buffered']
    #allocation15 [shape = 'u8[8192]{0}', space=vmem, size = 0x2000, scoped, tag = 'input window, operand 8, single buffered']
    #allocation16 [shape = 's32[1]{0}', space=sflag, size = 0x4, scoped, tag = 'scoped memory for _lambda_.1']
    #allocation17 [shape = 'u8[512]{0}', space=vmem, size = 0x400, scoped, tag = 'input window, operand 10, single buffered']
    #allocation18 [shape = 'u8[512]{0}', space=vmem, size = 0x400, scoped, tag = 'input window, operand 11, single buffered']
    #allocation19 [shape = 's32[1]{0}', space=sflag, size = 0x4, scoped, tag = 'scoped memory for _lambda_.1']
    #allocation20 [shape = 'u8[2048]{0}', space=vmem, size = 0x800, scoped, tag = 'input window, operand 20, single buffered']
    %26 = vsyncpa [#allocation5], 0
    %27 = vsyncpa [#allocation7], 0
    %28 = vsyncpa [#allocation10], 0
    %29 = vsyncpa [#allocation13], 0
    %30 = vsyncpa [#allocation16], 0
    %31 = vsyncpa [#allocation19], 0
    // Predicated region
    $region2: #{_lambda_.1} parent=1 // pred_check
      _
    $region3: #{_lambda_.1} parent=1 // pred_check_branch
      %33 = sbr.rel (0) target = $region5
    $region4: #{_lambda_.1} parent=1 // pred_region
      _
    $region5: #{_lambda_.1} parent=1 // pred_fallthru
      _
    // Predicated region
    $region6: #{_lambda_.1} parent=1 // pred_check
      _
    $region7: #{_lambda_.1} parent=1 // pred_check_branch
      %35 = sbr.rel (0) target = $region9
    $region8: #{_lambda_.1} parent=1 // pred_region
      %37 = vsyncadd [#allocation5], 0
      %s39 = sshll.u32 %s1, 4
      %s40 = int_to_ptr.hbm [resolvable:$true] %s39
      %s41 = sshll.u32 [#allocation4], 4
      %s42 = int_to_ptr.vmem [resolvable:$true] %s41
      %44 = dma.hbm_to_vmem [thread:$0]  %s40, 64, %s42, [#allocation5]
    $region9: #{_lambda_.1} parent=1 // pred_fallthru
      _
    // Predicated region
    $region10: #{_lambda_.1} parent=1 // pred_check
      _
    $region11: #{_lambda_.1} parent=1 // pred_check_branch
      %46 = sbr.rel (0) target = $region13
    $region12: #{_lambda_.1} parent=1 // pred_region
      %48 = vsyncadd [#allocation7], 0
      %s49 = sshll.u32 %s2, 4
      %s50 = int_to_ptr.hbm [resolvable:$true] %s49
      %s51 = sshll.u32 [#allocation6], 4
      %s52 = int_to_ptr.vmem [resolvable:$true] %s51
      %57 = dma.hbm_to_vmem [thread:$0]  %s50, 256, %s52, [#allocation7], 64, 64, 4
    $region13: #{_lambda_.1} parent=1 // pred_fallthru
      _
    // Predicated region
    $region14: #{_lambda_.1} parent=1 // pred_check
      _
    $region15: #{_lambda_.1} parent=1 // pred_check_branch
      %59 = sbr.rel (0) target = $region17
    $region16: #{_lambda_.1} parent=1 // pred_region
      %61 = vsyncadd [#allocation7], 0
      %s63 = sshll.u32 %s3, 4
      %s64 = int_to_ptr.hbm [resolvable:$true] %s63
      %s65 = sshll.u32 [#allocation8], 4
      %s66 = int_to_ptr.vmem [resolvable:$true] %s65
      %68 = dma.hbm_to_vmem [thread:$0]  %s64, 16, %s66, [#allocation7]
    $region17: #{_lambda_.1} parent=1 // pred_fallthru
      _
    // Predicated region
    $region18: #{_lambda_.1} parent=1 // pred_check
      _
    $region19: #{_lambda_.1} parent=1 // pred_check_branch
      %70 = sbr.rel (0) target = $region21
    $region20: #{_lambda_.1} parent=1 // pred_region
      %72 = vsyncadd [#allocation10], 0
      %s73 = sshll.u32 %s4, 4
      %s74 = int_to_ptr.hbm [resolvable:$true] %s73
      %s75 = sshll.u32 [#allocation9], 4
      %s76 = int_to_ptr.vmem [resolvable:$true] %s75
      %81 = dma.hbm_to_vmem [thread:$0]  %s74, 256, %s76, [#allocation10], 64, 64, 4
    $region21: #{_lambda_.1} parent=1 // pred_fallthru
      _
    // Predicated region
    $region22: #{_lambda_.1} parent=1 // pred_check
      _
    $region23: #{_lambda_.1} parent=1 // pred_check_branch
      %83 = sbr.rel (0) target = $region25
    $region24: #{_lambda_.1} parent=1 // pred_region
      %85 = vsyncadd [#allocation10], 0
      %s86 = sshll.u32 %s5, 4
      %s87 = int_to_ptr.hbm [resolvable:$true] %s86
      %s88 = sshll.u32 [#allocation11], 4
      %s89 = int_to_ptr.vmem [resolvable:$true] %s88
      %94 = dma.hbm_to_vmem [thread:$0]  %s87, 256, %s89, [#allocation10], 64, 64, 4
    $region25: #{_lambda_.1} parent=1 // pred_fallthru
      _
    // Predicated region
    $region26: #{_lambda_.1} parent=1 // pred_check
      _
    $region27: #{_lambda_.1} parent=1 // pred_check_branch
      %96 = sbr.rel (0) target = $region29
    $region28: #{_lambda_.1} parent=1 // pred_region
      %98 = vsyncadd [#allocation13], 0
      %s100 = sshll.u32 %s6, 4
      %s101 = int_to_ptr.hbm [resolvable:$true] %s100
      %s102 = sshll.u32 [#allocation12], 4
      %s103 = int_to_ptr.vmem [resolvable:$true] %s102
      %105 = dma.hbm_to_vmem [thread:$0]  %s101, 16, %s103, [#allocation13]
    $region29: #{_lambda_.1} parent=1 // pred_fallthru
      _
    // Predicated region
    $region30: #{_lambda_.1} parent=1 // pred_check
      _
    $region31: #{_lambda_.1} parent=1 // pred_check_branch
      %107 = sbr.rel (0) target = $region33
    $region32: #{_lambda_.1} parent=1 // pred_region
      %109 = vsyncadd [#allocation13], 0
      %s110 = sshll.u32 %s7, 4
      %s111 = int_to_ptr.hbm [resolvable:$true] %s110
      %s112 = sshll.u32 [#allocation14], 4
      %s113 = int_to_ptr.vmem [resolvable:$true] %s112
      %118 = dma.hbm_to_vmem [thread:$0]  %s111, 256, %s113, [#allocation13], 64, 64, 4
    $region33: #{_lambda_.1} parent=1 // pred_fallthru
      _
    // Predicated region
    $region34: #{_lambda_.1} parent=1 // pred_check
      _
    $region35: #{_lambda_.1} parent=1 // pred_check_branch
      %120 = sbr.rel (0) target = $region37
    $region36: #{_lambda_.1} parent=1 // pred_region
      %122 = vsyncadd [#allocation16], 0
      %s123 = sshll.u32 %s8, 4
      %s124 = int_to_ptr.hbm [resolvable:$true] %s123
      %s125 = sshll.u32 [#allocation15], 4
      %s126 = int_to_ptr.vmem [resolvable:$true] %s125
      %131 = dma.hbm_to_vmem [thread:$0]  %s124, 256, %s126, [#allocation16], 64, 64, 4
    $region37: #{_lambda_.1} parent=1 // pred_fallthru
      _
    // Predicated region
    $region38: #{_lambda_.1} parent=1 // pred_check
      _
    $region39: #{_lambda_.1} parent=1 // pred_check_branch
      %133 = sbr.rel (0) target = $region41
    $region40: #{_lambda_.1} parent=1 // pred_region
      _
    $region41: #{_lambda_.1} parent=1 // pred_fallthru
      _
    // Predicated region
    $region42: #{_lambda_.1} parent=1 // pred_check
      _
    $region43: #{_lambda_.1} parent=1 // pred_check_branch
      %135 = sbr.rel (0) target = $region45
    $region44: #{_lambda_.1} parent=1 // pred_region
      %137 = vsyncadd [#allocation16], 0
      %s139 = sshll.u32 %s10, 4
      %s140 = int_to_ptr.hbm [resolvable:$true] %s139
      %s141 = sshll.u32 [#allocation17], 4
      %s142 = int_to_ptr.vmem [resolvable:$true] %s141
      %144 = dma.hbm_to_vmem [thread:$0]  %s140, 16, %s142, [#allocation16]
    $region45: #{_lambda_.1} parent=1 // pred_fallthru
      _
    // Predicated region
    $region46: #{_lambda_.1} parent=1 // pred_check
      _
    $region47: #{_lambda_.1} parent=1 // pred_check_branch
      %146 = sbr.rel (0) target = $region49
    $region48: #{_lambda_.1} parent=1 // pred_region
      %148 = vsyncadd [#allocation19], 0
      %s150 = sshll.u32 %s11, 4
      %s151 = int_to_ptr.hbm [resolvable:$true] %s150
      %s152 = sshll.u32 [#allocation18], 4
      %s153 = int_to_ptr.vmem [resolvable:$true] %s152
      %155 = dma.hbm_to_vmem [thread:$0]  %s151, 16, %s153, [#allocation19]
    $region49: #{_lambda_.1} parent=1 // pred_fallthru
      _
    // Predicated region
    $region50: #{_lambda_.1} parent=1 // pred_check
      _
    $region51: #{_lambda_.1} parent=1 // pred_check_branch
      %157 = sbr.rel (0) target = $region53
    $region52: #{_lambda_.1} parent=1 // pred_region
      _
    $region53: #{_lambda_.1} parent=1 // pred_fallthru
      _
    // Predicated region
    $region54: #{_lambda_.1} parent=1 // pred_check
      _
    $region55: #{_lambda_.1} parent=1 // pred_check_branch
      %159 = sbr.rel (0) target = $region57
    $region56: #{_lambda_.1} parent=1 // pred_region
      _
    $region57: #{_lambda_.1} parent=1 // pred_fallthru
      _
    // Predicated region
    $region58: #{_lambda_.1} parent=1 // pred_check
      _
    $region59: #{_lambda_.1} parent=1 // pred_check_branch
      %161 = sbr.rel (0) target = $region61
    $region60: #{_lambda_.1} parent=1 // pred_region
      _
    $region61: #{_lambda_.1} parent=1 // pred_fallthru
      _
    // Predicated region
    $region62: #{_lambda_.1} parent=1 // pred_check
      _
    $region63: #{_lambda_.1} parent=1 // pred_check_branch
      %163 = sbr.rel (0) target = $region65
    $region64: #{_lambda_.1} parent=1 // pred_region
      _
    $region65: #{_lambda_.1} parent=1 // pred_fallthru
      _
    // Predicated region
    $region66: #{_lambda_.1} parent=1 // pred_check
      _
    $region67: #{_lambda_.1} parent=1 // pred_check_branch
      %165 = sbr.rel (0) target = $region69
    $region68: #{_lambda_.1} parent=1 // pred_region
      _
    $region69: #{_lambda_.1} parent=1 // pred_fallthru
      _
    // Predicated region
    $region70: #{_lambda_.1} parent=1 // pred_check
      _
    $region71: #{_lambda_.1} parent=1 // pred_check_branch
      %167 = sbr.rel (0) target = $region73
    $region72: #{_lambda_.1} parent=1 // pred_region
      _
    $region73: #{_lambda_.1} parent=1 // pred_fallthru
      _
    // Predicated region
    $region74: #{_lambda_.1} parent=1 // pred_check
      _
    $region75: #{_lambda_.1} parent=1 // pred_check_branch
      %169 = sbr.rel (0) target = $region77
    $region76: #{_lambda_.1} parent=1 // pred_region
      _
    $region77: #{_lambda_.1} parent=1 // pred_fallthru
      _
    // Predicated region
    $region78: #{_lambda_.1} parent=1 // pred_check
      _
    $region79: #{_lambda_.1} parent=1 // pred_check_branch
      %171 = sbr.rel (0) target = $region81
    $region80: #{_lambda_.1} parent=1 // pred_region
      _
    $region81: #{_lambda_.1} parent=1 // pred_fallthru
      _
    // Predicated region
    $region82: #{_lambda_.1} parent=1 // pred_check
      _
    $region83: #{_lambda_.1} parent=1 // pred_check_branch
      %173 = sbr.rel (0) target = $region85
    $region84: #{_lambda_.1} parent=1 // pred_region
      %175 = vsyncadd [#allocation19], 0
      %s177 = sshll.u32 %s20, 4
      %s178 = int_to_ptr.hbm [resolvable:$true] %s177
      %s179 = sshll.u32 [#allocation20], 4
      %s180 = int_to_ptr.vmem [resolvable:$true] %s179
      %182 = dma.hbm_to_vmem [thread:$0]  %s178, 64, %s180, [#allocation19]
    $region85: #{_lambda_.1} parent=1 // pred_fallthru
      _
    // Predicated region
    $region86: #{_lambda_.1} parent=1 // pred_check
      _
    $region87: #{_lambda_.1} parent=1 // pred_check_branch
      %184 = sbr.rel (0) target = $region89
    $region88: #{_lambda_.1} parent=1 // pred_region
      %186 = dma.done [#allocation5], 64
    $region89: #{_lambda_.1} parent=1 // pred_fallthru
      _
    // Predicated region
    $region90: #{_lambda_.1} parent=1 // pred_check
      _
    $region91: #{_lambda_.1} parent=1 // pred_check_branch
      %188 = sbr.rel (0) target = $region93
    $region92: #{_lambda_.1} parent=1 // pred_region
      %190 = dma.done [#allocation7], 256
    $region93: #{_lambda_.1} parent=1 // pred_fallthru
      _
    // Predicated region
    $region94: #{_lambda_.1} parent=1 // pred_check
      _
    $region95: #{_lambda_.1} parent=1 // pred_check_branch
      %192 = sbr.rel (0) target = $region97
    $region96: #{_lambda_.1} parent=1 // pred_region
      %194 = dma.done [#allocation7], 16
    $region97: #{_lambda_.1} parent=1 // pred_fallthru
      _
    // Predicated region
    $region98: #{_lambda_.1} parent=1 // pred_check
      _
    $region99: #{_lambda_.1} parent=1 // pred_check_branch
      %196 = sbr.rel (0) target = $region101
    $region100: #{_lambda_.1} parent=1 // pred_region
      %198 = dma.done [#allocation10], 256
    $region101: #{_lambda_.1} parent=1 // pred_fallthru
      _
    // Predicated region
    $region102: #{_lambda_.1} parent=1 // pred_check
      _
    $region103: #{_lambda_.1} parent=1 // pred_check_branch
      %200 = sbr.rel (0) target = $region105
    $region104: #{_lambda_.1} parent=1 // pred_region
      %202 = dma.done [#allocation10], 256
    $region105: #{_lambda_.1} parent=1 // pred_fallthru
      _
    // Predicated region
    $region106: #{_lambda_.1} parent=1 // pred_check
      _
    $region107: #{_lambda_.1} parent=1 // pred_check_branch
      %204 = sbr.rel (0) target = $region109
    $region108: #{_lambda_.1} parent=1 // pred_region
      %206 = dma.done [#allocation13], 16
    $region109: #{_lambda_.1} parent=1 // pred_fallthru
      _
    // Predicated region
    $region110: #{_lambda_.1} parent=1 // pred_check
      _
    $region111: #{_lambda_.1} parent=1 // pred_check_branch
      %208 = sbr.rel (0) target = $region113
    $region112: #{_lambda_.1} parent=1 // pred_region
      %210 = dma.done [#allocation13], 256
    $region113: #{_lambda_.1} parent=1 // pred_fallthru
      _
    // Predicated region
    $region114: #{_lambda_.1} parent=1 // pred_check
      _
    $region115: #{_lambda_.1} parent=1 // pred_check_branch
      %212 = sbr.rel (0) target = $region117
    $region116: #{_lambda_.1} parent=1 // pred_region
      %214 = dma.done [#allocation16], 256
    $region117: #{_lambda_.1} parent=1 // pred_fallthru
      _
    // Predicated region
    $region118: #{_lambda_.1} parent=1 // pred_check
      _
    $region119: #{_lambda_.1} parent=1 // pred_check_branch
      %216 = sbr.rel (0) target = $region121
    $region120: #{_lambda_.1} parent=1 // pred_region
      %218 = dma.done [#allocation16], 16
    $region121: #{_lambda_.1} parent=1 // pred_fallthru
      _
    // Predicated region
    $region122: #{_lambda_.1} parent=1 // pred_check
      _
    $region123: #{_lambda_.1} parent=1 // pred_check_branch
      %220 = sbr.rel (0) target = $region125
    $region124: #{_lambda_.1} parent=1 // pred_region
      %222 = dma.done [#allocation19], 16
    $region125: #{_lambda_.1} parent=1 // pred_fallthru
      _
    // Predicated region
    $region126: #{_lambda_.1} parent=1 // pred_check
      _
    $region127: #{_lambda_.1} parent=1 // pred_check_branch
      %224 = sbr.rel (0) target = $region129
    $region128: #{_lambda_.1} parent=1 // pred_region
      %226 = dma.done [#allocation19], 64
    $region129: #{_lambda_.1} parent=1 // pred_fallthru
      _
    %v228 = vld [vmem:[%s0] sm:$0xf]
    %v229 = vld [vmem:[%s0 + $0x4] sm:$0xf]
    %v230 = vld [vmem:[%s0 + $0x8] sm:$0xf]
    %v231 = vld [vmem:[%s0 + $0xc] sm:$0xf]
    %v232 = vld [vmem:[%s0 + $0x10] sm:$0xf]
    %v233 = vld [vmem:[%s0 + $0x14] sm:$0xf]
    %v234 = vld [vmem:[%s0 + $0x18] sm:$0xf]
    %v235 = vld [vmem:[%s0 + $0x1c] sm:$0xf]
    %v236 = vld [vmem:[#allocation4] sm:$0xf]
    %v237 = vld [vmem:[#allocation8] sm:$0x1]
    %v239 = vperm.slane %v237, 0
    %v249 = vunpack.c.l.b16 %v228
    %v250 = vunpack.c.l.b16 %v229
    %v251 = vunpack.c.l.b16 %v230
    %v252 = vunpack.c.l.b16 %v231
    %v253 = vunpack.c.l.b16 %v232
    %v254 = vunpack.c.l.b16 %v233
    %v255 = vunpack.c.l.b16 %v234
    %v256 = vunpack.c.l.b16 %v235
    %v257 = vpack.c.b16 %v250, %v249
    %v258 = vpack.c.b16 %v252, %v251
    %v259 = vpack.c.b16 %v254, %v253
    %v260 = vpack.c.b16 %v256, %v255
    %vm261 = vcmask 64512
    %v263 = vsel %vm261, %v257, 0
    %v266 = vsel %vm261, %v258, 0
    %v269 = vsel %vm261, %v259, 0
    %v272 = vsel %vm261, %v260, 0
    %vm274 = vcmask 1043456
    %v276 = vsel %vm274, %v236, 0
    %278 = vmatpush.bf16.msra.mxu0 0
    %279 = vmatpush.bf16.msra.mxu0 0
    %280 = vmatpush.bf16.msra.mxu0 0
    %281 = vmatpush.bf16.msra.mxu0 0
    %282 = vmatpush.bf16.msra.mxu0 0
    %283 = vmatpush.bf16.msra.mxu0 0
    %284 = vmatpush.bf16.msra.mxu0 0
    %285 = vmatpush.bf16.msra.mxu0 %v276
    %286 = vmatmul.bf16.gmra.mxu0 %v263
    %v287 = vpop.f32.mrf.mxu0
    %v288 = vadd.f32 %v239, %v287
    %v289 = vpop.f32.mrf.mxu0
    %v290 = vadd.f32 %v239, %v289
    %291 = vmatmul.bf16.gmra.mxu0 %v266
    %v292 = vpop.f32.mrf.mxu0
    %v293 = vadd.f32 %v239, %v292
    %v294 = vpop.f32.mrf.mxu0
    %v295 = vadd.f32 %v239, %v294
    %296 = vmatmul.bf16.gmra.mxu0 %v269
    %v297 = vpop.f32.mrf.mxu0
    %v298 = vadd.f32 %v239, %v297
    %v299 = vpop.f32.mrf.mxu0
    %v300 = vadd.f32 %v239, %v299
    %301 = vmatmul.bf16.gmra.mxu0 %v272
    %v302 = vpop.f32.mrf.mxu0
    %v303 = vadd.f32 %v239, %v302
    %v304 = vpop.f32.mrf.mxu0
    %v305 = vadd.f32 %v239, %v304
    %306 = vdwg.mxu0
    %307 = vst [vmem:[#allocation3] sm:$0xff] %v288
    %308 = vst [vmem:[#allocation3 + $0x8] sm:$0xff] %v290
    %309 = vst [vmem:[#allocation3 + $0x10] sm:$0xff] %v293
    %310 = vst [vmem:[#allocation3 + $0x18] sm:$0xff] %v295
    %311 = vst [vmem:[#allocation3 + $0x20] sm:$0xff] %v298
    %312 = vst [vmem:[#allocation3 + $0x28] sm:$0xff] %v300
    %313 = vst [vmem:[#allocation3 + $0x30] sm:$0xff] %v303
    %314 = vst [vmem:[#allocation3 + $0x38] sm:$0xff] %v305
    %v315 = vld [vmem:[#allocation6] sm:$0xf]
    %v316 = vld [vmem:[#allocation6 + $0x4] sm:$0xf]
    %v317 = vld [vmem:[#allocation6 + $0x8] sm:$0xf]
    %v318 = vld [vmem:[#allocation6 + $0xc] sm:$0xf]
    %v319 = vld [vmem:[#allocation3] sm:$0xff]
    %v324 = vunpack.c.l.b16 %v315
    %v325 = vunpack.c.l.b16 %v316
    %v326 = vunpack.c.l.b16 %v317
    %v327 = vunpack.c.l.b16 %v318
    %v328 = vpack.c.b16 %v325, %v324
    %v329 = vpack.c.b16 %v327, %v326
    %vm332 = vcmask 261120
    %v334 = vsel %vm332, 0, 0
    %336 = vmatpush.bf16.msra.mxu0 0
    %337 = vmatpush.bf16.msra.mxu0 0
    %338 = vmatpush.bf16.msra.mxu0 0
    %339 = vmatpush.bf16.msra.mxu0 0
    %340 = vmatpush.bf16.msra.mxu0 0
    %341 = vmatpush.bf16.msra.mxu0 0
    %342 = vmatpush.bf16.msra.mxu0 %v329
    %343 = vmatpush.bf16.msra.mxu0 %v328
    %344 = vmatmul.bf16.gmra.mxu0 %v334
    %v345 = vpop.f32.mrf.mxu0
    %v346 = vadd.f32 0.0, %v345
    %v347 = vpop.f32.mrf.mxu0
    %348 = vdwg.mxu0
    %v349 = vadd.f32 %v319, %v346
    %v350 = vxor.u32 %v349, 2147483648
    %v351 = vmul.f32 %v350, 1.442695
    %v352 = vpow.pop %v351
    %v353 = vadd.f32 %v352, 1.0
    %v354 = vrcp.pop %v353
    %v355 = vmul.f32 %v353, %v354
    %v356 = vsub.f32 1.0, %v355
    %v357 = vmul.f32 %v354, %v356
    %v358 = vadd.f32 %v354, %v357
    %vm359 = vweird.f32 %v353
    %vm360 = vweird.f32 %v354
    %vm361 = vmor %vm359, %vm360
    %v362 = vsel %vm361, %v354, %v358
    %v363 = vand.u32 2147483647, %v353
    %vm364 = vcmp.eq.f32.partialorder %v363, 8.507059e+37
    %v365 = vand.u32 %v353, 2147483648
    %v366 = vor.u32 1.1754944e-38, %v365
    %v367 = vsel %vm364, %v366, %v362
    %v368 = vmul.f32 1.0, %v367
    %v369 = vtanh.pop %v349
    %v370 = vmul.f32 %v368, 0.0
    %372 = vrot.lane.b32.xlu0 %v369, 64
    %v373 = vpop.permute.xlu0 %372
    %v375 = vmul.f32 %v368, %v373
    %377 = vrot.lane.b32.xlu0 %v375, 32
    %v378 = vpop.permute.xlu0 %377
    %v380 = vadd.f32 %v370, %v378
    %v381 = vtanh.pop %v380
    %383 = vrot.lane.b32.xlu0 %v381, 64
    %v384 = vpop.permute.xlu0 %383
    %v386 = vmul.f32 %v368, %v384
    %v387 = vpack.c.bf16 %v386, %v386
    %389 = vrot.lane.b32.xlu0 %v387, 32
    %v390 = vpop.permute.xlu0 %389
    %vm392 = vcmask 257024
    %393 = vst.msk [vmem:[#allocation2] sm:$0xf] %vm392, %v390
    %s394 = scalar_lea.vmem [#allocation3], 8
    %v395 = vld [vmem:[%s394] sm:$0xff]
    %v396 = vunpack.c.l.b16 %v387
    %v397 = vpack.c.b16 %v396, %v396
    %398 = vrot.lane.b32.xlu0 %v397, 32
    %v399 = vpop.permute.xlu0 %398
    %v401 = vsel %vm332, %v399, 0
    %403 = vmatpush.bf16.msra.mxu0 0
    %404 = vmatpush.bf16.msra.mxu0 0
    %405 = vmatpush.bf16.msra.mxu0 0
    %406 = vmatpush.bf16.msra.mxu0 0
    %407 = vmatpush.bf16.msra.mxu0 0
    %408 = vmatpush.bf16.msra.mxu0 0
    %409 = vmatpush.bf16.msra.mxu0 %v329
    %410 = vmatpush.bf16.msra.mxu0 %v328
    %411 = vmatmul.bf16.gmra.mxu0 %v401
    %v412 = vpop.f32.mrf.mxu0
    %v413 = vadd.f32 0.0, %v412
    %v414 = vpop.f32.mrf.mxu0
    %415 = vdwg.mxu0
    %v416 = vadd.f32 %v395, %v413
    %v417 = vxor.u32 %v416, 2147483648
    %v418 = vmul.f32 %v417, 1.442695
    %v419 = vpow.pop %v418
    %v420 = vadd.f32 %v419, 1.0
    %v421 = vrcp.pop %v420
    %v422 = vmul.f32 %v420, %v421
    %v423 = vsub.f32 1.0, %v422
    %v424 = vmul.f32 %v421, %v423
    %v425 = vadd.f32 %v421, %v424
    %vm426 = vweird.f32 %v420
    %vm427 = vweird.f32 %v421
    %vm428 = vmor %vm426, %vm427
    %v429 = vsel %vm428, %v421, %v425
    %v430 = vand.u32 2147483647, %v420
    %vm431 = vcmp.eq.f32.partialorder %v430, 8.507059e+37
    %v432 = vand.u32 %v420, 2147483648
    %v433 = vor.u32 1.1754944e-38, %v432
    %v434 = vsel %vm431, %v433, %v429
    %v435 = vmul.f32 1.0, %v434
    %v436 = vtanh.pop %v416
    %v437 = vmul.f32 %v435, %v380
    %439 = vrot.lane.b32.xlu0 %v436, 64
    %v440 = vpop.permute.xlu0 %439
    %v442 = vmul.f32 %v435, %v440
    %444 = vrot.lane.b32.xlu0 %v442, 32
    %v445 = vpop.permute.xlu0 %444
    %v447 = vadd.f32 %v437, %v445
    %v448 = vtanh.pop %v447
    %450 = vrot.lane.b32.xlu0 %v448, 64
    %v451 = vpop.permute.xlu0 %450
    %v453 = vmul.f32 %v435, %v451
    %v454 = vpack.c.bf16 %v453, %v453
    %456 = vrot.lane.b32.xlu0 %v454, 32
    %v457 = vpop.permute.xlu0 %456
    %s459 = scalar_lea.vmem [#allocation2], 4
    %460 = vst.msk [vmem:[%s459] sm:$0xf] %vm392, %v457
    %s461 = scalar_lea.vmem [#allocation3], 16
    %v462 = vld [vmem:[%s461] sm:$0xff]
    %v463 = vunpack.c.l.b16 %v454
    %v464 = vpack.c.b16 %v463, %v463
    %465 = vrot.lane.b32.xlu0 %v464, 32
    %v466 = vpop.permute.xlu0 %465
    %v468 = vsel %vm332, %v466, 0
    %470 = vmatpush.bf16.msra.mxu0 0
    %471 = vmatpush.bf16.msra.mxu0 0
    %472 = vmatpush.bf16.msra.mxu0 0
    %473 = vmatpush.bf16.msra.mxu0 0
    %474 = vmatpush.bf16.msra.mxu0 0
    %475 = vmatpush.bf16.msra.mxu0 0
    %476 = vmatpush.bf16.msra.mxu0 %v329
    %477 = vmatpush.bf16.msra.mxu0 %v328
    %478 = vmatmul.bf16.gmra.mxu0 %v468
    %v479 = vpop.f32.mrf.mxu0
    %v480 = vadd.f32 0.0, %v479
    %v481 = vpop.f32.mrf.mxu0
    %482 = vdwg.mxu0
    %v483 = vadd.f32 %v462, %v480
    %v484 = vxor.u32 %v483, 2147483648
    %v485 = vmul.f32 %v484, 1.442695
    %v486 = vpow.pop %v485
    %v487 = vadd.f32 %v486, 1.0
    %v488 = vrcp.pop %v487
    %v489 = vmul.f32 %v487, %v488
    %v490 = vsub.f32 1.0, %v489
    %v491 = vmul.f32 %v488, %v490
    %v492 = vadd.f32 %v488, %v491
    %vm493 = vweird.f32 %v487
    %vm494 = vweird.f32 %v488
    %vm495 = vmor %vm493, %vm494
    %v496 = vsel %vm495, %v488, %v492
    %v497 = vand.u32 2147483647, %v487
    %vm498 = vcmp.eq.f32.partialorder %v497, 8.507059e+37
    %v499 = vand.u32 %v487, 2147483648
    %v500 = vor.u32 1.1754944e-38, %v499
    %v501 = vsel %vm498, %v500, %v496
    %v502 = vmul.f32 1.0, %v501
    %v503 = vtanh.pop %v483
    %v504 = vmul.f32 %v502, %v447
    %506 = vrot.lane.b32.xlu0 %v503, 64
    %v507 = vpop.permute.xlu0 %506
    %v509 = vmul.f32 %v502, %v507
    %511 = vrot.lane.b32.xlu0 %v509, 32
    %v512 = vpop.permute.xlu0 %511
    %v514 = vadd.f32 %v504, %v512
    %v515 = vtanh.pop %v514
    %517 = vrot.lane.b32.xlu0 %v515, 64
    %v518 = vpop.permute.xlu0 %517
    %v520 = vmul.f32 %v502, %v518
    %v521 = vpack.c.bf16 %v520, %v520
    %523 = vrot.lane.b32.xlu0 %v521, 32
    %v524 = vpop.permute.xlu0 %523
    %s526 = scalar_lea.vmem [#allocation2], 8
    %527 = vst.msk [vmem:[%s526] sm:$0xf] %vm392, %v524
    %s528 = scalar_lea.vmem [#allocation3], 24
    %v529 = vld [vmem:[%s528] sm:$0xff]
    %v530 = vunpack.c.l.b16 %v521
    %v531 = vpack.c.b16 %v530, %v530
    %532 = vrot.lane.b32.xlu0 %v531, 32
    %v533 = vpop.permute.xlu0 %532
    %v535 = vsel %vm332, %v533, 0
    %537 = vmatpush.bf16.msra.mxu0 0
    %538 = vmatpush.bf16.msra.mxu0 0
    %539 = vmatpush.bf16.msra.mxu0 0
    %540 = vmatpush.bf16.msra.mxu0 0
    %541 = vmatpush.bf16.msra.mxu0 0
    %542 = vmatpush.bf16.msra.mxu0 0
    %543 = vmatpush.bf16.msra.mxu0 %v329
    %544 = vmatpush.bf16.msra.mxu0 %v328
    %545 = vmatmul.bf16.gmra.mxu0 %v535
    %v546 = vpop.f32.mrf.mxu0
    %v547 = vadd.f32 0.0, %v546
    %v548 = vpop.f32.mrf.mxu0
    %549 = vdwg.mxu0
    %v550 = vadd.f32 %v529, %v547
    %v551 = vxor.u32 %v550, 2147483648
    %v552 = vmul.f32 %v551, 1.442695
    %v553 = vpow.pop %v552
    %v554 = vadd.f32 %v553, 1.0
    %v555 = vrcp.pop %v554
    %v556 = vmul.f32 %v554, %v555
    %v557 = vsub.f32 1.0, %v556
    %v558 = vmul.f32 %v555, %v557
    %v559 = vadd.f32 %v555, %v558
    %vm560 = vweird.f32 %v554
    %vm561 = vweird.f32 %v555
    %vm562 = vmor %vm560, %vm561
    %v563 = vsel %vm562, %v555, %v559
    %v564 = vand.u32 2147483647, %v554
    %vm565 = vcmp.eq.f32.partialorder %v564, 8.507059e+37
    %v566 = vand.u32 %v554, 2147483648
    %v567 = vor.u32 1.1754944e-38, %v566
    %v568 = vsel %vm565, %v567, %v563
    %v569 = vmul.f32 1.0, %v568
    %v570 = vtanh.pop %v550
    %v571 = vmul.f32 %v569, %v514
    %573 = vrot.lane.b32.xlu0 %v570, 64
    %v574 = vpop.permute.xlu0 %573
    %v576 = vmul.f32 %v569, %v574
    %578 = vrot.lane.b32.xlu0 %v576, 32
    %v579 = vpop.permute.xlu0 %578
    %v581 = vadd.f32 %v571, %v579
    %v582 = vtanh.pop %v581
    %584 = vrot.lane.b32.xlu0 %v582, 64
    %v585 = vpop.permute.xlu0 %584
    %v587 = vmul.f32 %v569, %v585
    %v588 = vpack.c.bf16 %v587, %v587
    %590 = vrot.lane.b32.xlu0 %v588, 32
    %v591 = vpop.permute.xlu0 %590
    %s593 = scalar_lea.vmem [#allocation2], 12
    %594 = vst.msk [vmem:[%s593] sm:$0xf] %vm392, %v591
    %s595 = scalar_lea.vmem [#allocation3], 32
    %v596 = vld [vmem:[%s595] sm:$0xff]
    %v597 = vunpack.c.l.b16 %v588
    %v598 = vpack.c.b16 %v597, %v597
    %599 = vrot.lane.b32.xlu0 %v598, 32
    %v600 = vpop.permute.xlu0 %599
    %v602 = vsel %vm332, %v600, 0
    %604 = vmatpush.bf16.msra.mxu0 0
    %605 = vmatpush.bf16.msra.mxu0 0
    %606 = vmatpush.bf16.msra.mxu0 0
    %607 = vmatpush.bf16.msra.mxu0 0
    %608 = vmatpush.bf16.msra.mxu0 0
    %609 = vmatpush.bf16.msra.mxu0 0
    %610 = vmatpush.bf16.msra.mxu0 %v329
    %611 = vmatpush.bf16.msra.mxu0 %v328
    %612 = vmatmul.bf16.gmra.mxu0 %v602
    %v613 = vpop.f32.mrf.mxu0
    %v614 = vadd.f32 0.0, %v613
    %v615 = vpop.f32.mrf.mxu0
    %616 = vdwg.mxu0
    %v617 = vadd.f32 %v596, %v614
    %v618 = vxor.u32 %v617, 2147483648
    %v619 = vmul.f32 %v618, 1.442695
    %v620 = vpow.pop %v619
    %v621 = vadd.f32 %v620, 1.0
    %v622 = vrcp.pop %v621
    %v623 = vmul.f32 %v621, %v622
    %v624 = vsub.f32 1.0, %v623
    %v625 = vmul.f32 %v622, %v624
    %v626 = vadd.f32 %v622, %v625
    %vm627 = vweird.f32 %v621
    %vm628 = vweird.f32 %v622
    %vm629 = vmor %vm627, %vm628
    %v630 = vsel %vm629, %v622, %v626
    %v631 = vand.u32 2147483647, %v621
    %vm632 = vcmp.eq.f32.partialorder %v631, 8.507059e+37
    %v633 = vand.u32 %v621, 2147483648
    %v634 = vor.u32 1.1754944e-38, %v633
    %v635 = vsel %vm632, %v634, %v630
    %v636 = vmul.f32 1.0, %v635
    %v637 = vtanh.pop %v617
    %v638 = vmul.f32 %v636, %v581
    %640 = vrot.lane.b32.xlu0 %v637, 64
    %v641 = vpop.permute.xlu0 %640
    %v643 = vmul.f32 %v636, %v641
    %645 = vrot.lane.b32.xlu0 %v643, 32
    %v646 = vpop.permute.xlu0 %645
    %v648 = vadd.f32 %v638, %v646
    %v649 = vtanh.pop %v648
    %651 = vrot.lane.b32.xlu0 %v649, 64
    %v652 = vpop.permute.xlu0 %651
    %v654 = vmul.f32 %v636, %v652
    %v655 = vpack.c.bf16 %v654, %v654
    %657 = vrot.lane.b32.xlu0 %v655, 32
    %v658 = vpop.permute.xlu0 %657
    %s660 = scalar_lea.vmem [#allocation2], 16
    %661 = vst.msk [vmem:[%s660] sm:$0xf] %vm392, %v658
    %s662 = scalar_lea.vmem [#allocation3], 40
    %v663 = vld [vmem:[%s662] sm:$0xff]
    %v664 = vunpack.c.l.b16 %v655
    %v665 = vpack.c.b16 %v664, %v664
    %666 = vrot.lane.b32.xlu0 %v665, 32
    %v667 = vpop.permute.xlu0 %666
    %v669 = vsel %vm332, %v667, 0
    %671 = vmatpush.bf16.msra.mxu0 0
    %672 = vmatpush.bf16.msra.mxu0 0
    %673 = vmatpush.bf16.msra.mxu0 0
    %674 = vmatpush.bf16.msra.mxu0 0
    %675 = vmatpush.bf16.msra.mxu0 0
    %676 = vmatpush.bf16.msra.mxu0 0
    %677 = vmatpush.bf16.msra.mxu0 %v329
    %678 = vmatpush.bf16.msra.mxu0 %v328
    %679 = vmatmul.bf16.gmra.mxu0 %v669
    %v680 = vpop.f32.mrf.mxu0
    %v681 = vadd.f32 0.0, %v680
    %v682 = vpop.f32.mrf.mxu0
    %683 = vdwg.mxu0
    %v684 = vadd.f32 %v663, %v681
    %v685 = vxor.u32 %v684, 2147483648
    %v686 = vmul.f32 %v685, 1.442695
    %v687 = vpow.pop %v686
    %v688 = vadd.f32 %v687, 1.0
    %v689 = vrcp.pop %v688
    %v690 = vmul.f32 %v688, %v689
    %v691 = vsub.f32 1.0, %v690
    %v692 = vmul.f32 %v689, %v691
    %v693 = vadd.f32 %v689, %v692
    %vm694 = vweird.f32 %v688
    %vm695 = vweird.f32 %v689
    %vm696 = vmor %vm694, %vm695
    %v697 = vsel %vm696, %v689, %v693
    %v698 = vand.u32 2147483647, %v688
    %vm699 = vcmp.eq.f32.partialorder %v698, 8.507059e+37
    %v700 = vand.u32 %v688, 2147483648
    %v701 = vor.u32 1.1754944e-38, %v700
    %v702 = vsel %vm699, %v701, %v697
    %v703 = vmul.f32 1.0, %v702
    %v704 = vtanh.pop %v684
    %v705 = vmul.f32 %v703, %v648
    %707 = vrot.lane.b32.xlu0 %v704, 64
    %v708 = vpop.permute.xlu0 %707
    %v710 = vmul.f32 %v703, %v708
    %712 = vrot.lane.b32.xlu0 %v710, 32
    %v713 = vpop.permute.xlu0 %712
    %v715 = vadd.f32 %v705, %v713
    %v716 = vtanh.pop %v715
    %718 = vrot.lane.b32.xlu0 %v716, 64
    %v719 = vpop.permute.xlu0 %718
    %v721 = vmul.f32 %v703, %v719
    %v722 = vpack.c.bf16 %v721, %v721
    %724 = vrot.lane.b32.xlu0 %v722, 32
    %v725 = vpop.permute.xlu0 %724
    %s727 = scalar_lea.vmem [#allocation2], 20
    %728 = vst.msk [vmem:[%s727] sm:$0xf] %vm392, %v725
    %s729 = scalar_lea.vmem [#allocation3], 48
    %v730 = vld [vmem:[%s729] sm:$0xff]
    %v731 = vunpack.c.l.b16 %v722
    %v732 = vpack.c.b16 %v731, %v731
    %733 = vrot.lane.b32.xlu0 %v732, 32
    %v734 = vpop.permute.xlu0 %733
    %v736 = vsel %vm332, %v734, 0
    %738 = vmatpush.bf16.msra.mxu0 0
    %739 = vmatpush.bf16.msra.mxu0 0
    %740 = vmatpush.bf16.msra.mxu0 0
    %741 = vmatpush.bf16.msra.mxu0 0
    %742 = vmatpush.bf16.msra.mxu0 0
    %743 = vmatpush.bf16.msra.mxu0 0
    %744 = vmatpush.bf16.msra.mxu0 %v329
    %745 = vmatpush.bf16.msra.mxu0 %v328
    %746 = vmatmul.bf16.gmra.mxu0 %v736
    %v747 = vpop.f32.mrf.mxu0
    %v748 = vadd.f32 0.0, %v747
    %v749 = vpop.f32.mrf.mxu0
    %750 = vdwg.mxu0
    %v751 = vadd.f32 %v730, %v748
    %v752 = vxor.u32 %v751, 2147483648
    %v753 = vmul.f32 %v752, 1.442695
    %v754 = vpow.pop %v753
    %v755 = vadd.f32 %v754, 1.0
    %v756 = vrcp.pop %v755
    %v757 = vmul.f32 %v755, %v756
    %v758 = vsub.f32 1.0, %v757
    %v759 = vmul.f32 %v756, %v758
    %v760 = vadd.f32 %v756, %v759
    %vm761 = vweird.f32 %v755
    %vm762 = vweird.f32 %v756
    %vm763 = vmor %vm761, %vm762
    %v764 = vsel %vm763, %v756, %v760
    %v765 = vand.u32 2147483647, %v755
    %vm766 = vcmp.eq.f32.partialorder %v765, 8.507059e+37
    %v767 = vand.u32 %v755, 2147483648
    %v768 = vor.u32 1.1754944e-38, %v767
    %v769 = vsel %vm766, %v768, %v764
    %v770 = vmul.f32 1.0, %v769
    %v771 = vtanh.pop %v751
    %v772 = vmul.f32 %v770, %v715
    %774 = vrot.lane.b32.xlu0 %v771, 64
    %v775 = vpop.permute.xlu0 %774
    %v777 = vmul.f32 %v770, %v775
    %779 = vrot.lane.b32.xlu0 %v777, 32
    %v780 = vpop.permute.xlu0 %779
    %v782 = vadd.f32 %v772, %v780
    %v783 = vtanh.pop %v782
    %785 = vrot.lane.b32.xlu0 %v783, 64
    %v786 = vpop.permute.xlu0 %785
    %v788 = vmul.f32 %v770, %v786
    %v789 = vpack.c.bf16 %v788, %v788
    %791 = vrot.lane.b32.xlu0 %v789, 32
    %v792 = vpop.permute.xlu0 %791
    %s794 = scalar_lea.vmem [#allocation2], 24
    %795 = vst.msk [vmem:[%s794] sm:$0xf] %vm392, %v792
    %s796 = scalar_lea.vmem [#allocation3], 56
    %v797 = vld [vmem:[%s796] sm:$0xff]
    %v798 = vunpack.c.l.b16 %v789
    %v799 = vpack.c.b16 %v798, %v798
    %800 = vrot.lane.b32.xlu0 %v799, 32
    %v801 = vpop.permute.xlu0 %800
    %v803 = vsel %vm332, %v801, 0
    %805 = vmatpush.bf16.msra.mxu0 0
    %806 = vmatpush.bf16.msra.mxu0 0
    %807 = vmatpush.bf16.msra.mxu0 0
    %808 = vmatpush.bf16.msra.mxu0 0
    %809 = vmatpush.bf16.msra.mxu0 0
    %810 = vmatpush.bf16.msra.mxu0 0
    %811 = vmatpush.bf16.msra.mxu0 %v329
    %812 = vmatpush.bf16.msra.mxu0 %v328
    %813 = vmatmul.bf16.gmra.mxu0 %v803
    %v814 = vpop.f32.mrf.mxu0
    %v815 = vadd.f32 0.0, %v814
    %v816 = vpop.f32.mrf.mxu0
    %817 = vdwg.mxu0
    %v818 = vadd.f32 %v797, %v815
    %v819 = vxor.u32 %v818, 2147483648
    %v820 = vmul.f32 %v819, 1.442695
    %v821 = vpow.pop %v820
    %v822 = vadd.f32 %v821, 1.0
    %v823 = vrcp.pop %v822
    %v824 = vmul.f32 %v822, %v823
    %v825 = vsub.f32 1.0, %v824
    %v826 = vmul.f32 %v823, %v825
    %v827 = vadd.f32 %v823, %v826
    %vm828 = vweird.f32 %v822
    %vm829 = vweird.f32 %v823
    %vm830 = vmor %vm828, %vm829
    %v831 = vsel %vm830, %v823, %v827
    %v832 = vand.u32 2147483647, %v822
    %vm833 = vcmp.eq.f32.partialorder %v832, 8.507059e+37
    %v834 = vand.u32 %v822, 2147483648
    %v835 = vor.u32 1.1754944e-38, %v834
    %v836 = vsel %vm833, %v835, %v831
    %v837 = vmul.f32 1.0, %v836
    %v838 = vtanh.pop %v818
    %v839 = vmul.f32 %v837, %v782
    %841 = vrot.lane.b32.xlu0 %v838, 64
    %v842 = vpop.permute.xlu0 %841
    %v844 = vmul.f32 %v837, %v842
    %846 = vrot.lane.b32.xlu0 %v844, 32
    %v847 = vpop.permute.xlu0 %846
    %v849 = vadd.f32 %v839, %v847
    %v850 = vtanh.pop %v849
    %852 = vrot.lane.b32.xlu0 %v850, 64
    %v853 = vpop.permute.xlu0 %852
    %v855 = vmul.f32 %v837, %v853
    %v856 = vpack.c.bf16 %v855, %v855
    %858 = vrot.lane.b32.xlu0 %v856, 32
    %v859 = vpop.permute.xlu0 %858
    %s861 = scalar_lea.vmem [#allocation2], 28
    %862 = vst.msk [vmem:[%s861] sm:$0xf] %vm392, %v859
    %v863 = vld [vmem:[#allocation2] sm:$0xf]
    %v864 = vld [vmem:[#allocation2 + $0x4] sm:$0xf]
    %v865 = vld [vmem:[#allocation2 + $0x8] sm:$0xf]
    %v866 = vld [vmem:[#allocation2 + $0xc] sm:$0xf]
    %v867 = vld [vmem:[#allocation2 + $0x10] sm:$0xf]
    %v868 = vld [vmem:[#allocation2 + $0x14] sm:$0xf]
    %v869 = vld [vmem:[#allocation2 + $0x18] sm:$0xf]
    %v870 = vld [vmem:[#allocation2 + $0x1c] sm:$0xf]
    %v871 = vld [vmem:[#allocation9] sm:$0xf]
    %v872 = vld [vmem:[#allocation9 + $0x4] sm:$0xf]
    %v873 = vld [vmem:[#allocation9 + $0x8] sm:$0xf]
    %v874 = vld [vmem:[#allocation9 + $0xc] sm:$0xf]
    %v875 = vld [vmem:[#allocation12] sm:$0x1]
    %v877 = vperm.slane %v875, 0
    %v887 = vunpack.c.l.b16 %v863
    %v888 = vunpack.c.l.b16 %v864
    %v889 = vunpack.c.l.b16 %v865
    %v890 = vunpack.c.l.b16 %v866
    %v891 = vunpack.c.l.b16 %v867
    %v892 = vunpack.c.l.b16 %v868
    %v893 = vunpack.c.l.b16 %v869
    %v894 = vunpack.c.l.b16 %v870
    %v895 = vpack.c.b16 %v888, %v887
    %v896 = vpack.c.b16 %v890, %v889
    %v897 = vpack.c.b16 %v892, %v891
    %v898 = vpack.c.b16 %v894, %v893
    %v903 = vunpack.c.l.b16 %v871
    %v904 = vunpack.c.l.b16 %v872
    %v905 = vunpack.c.l.b16 %v873
    %v906 = vunpack.c.l.b16 %v874
    %v907 = vpack.c.b16 %v904, %v903
    %v908 = vpack.c.b16 %v906, %v905
    %v912 = vsel %vm332, %v895, 0
    %v915 = vsel %vm332, %v896, 0
    %v918 = vsel %vm332, %v897, 0
    %v921 = vsel %vm332, %v898, 0
    %923 = vmatpush.bf16.msra.mxu0 0
    %924 = vmatpush.bf16.msra.mxu0 0
    %925 = vmatpush.bf16.msra.mxu0 0
    %926 = vmatpush.bf16.msra.mxu0 0
    %927 = vmatpush.bf16.msra.mxu0 0
    %928 = vmatpush.bf16.msra.mxu0 0
    %929 = vmatpush.bf16.msra.mxu0 %v908
    %930 = vmatpush.bf16.msra.mxu0 %v907
    %931 = vmatmul.bf16.gmra.mxu0 %v912
    %v932 = vpop.f32.mrf.mxu0
    %v933 = vadd.f32 %v877, %v932
    %v934 = vpop.f32.mrf.mxu0
    %v935 = vadd.f32 %v877, %v934
    %936 = vmatmul.bf16.gmra.mxu0 %v915
    %v937 = vpop.f32.mrf.mxu0
    %v938 = vadd.f32 %v877, %v937
    %v939 = vpop.f32.mrf.mxu0
    %v940 = vadd.f32 %v877, %v939
    %941 = vmatmul.bf16.gmra.mxu0 %v918
    %v942 = vpop.f32.mrf.mxu0
    %v943 = vadd.f32 %v877, %v942
    %v944 = vpop.f32.mrf.mxu0
    %v945 = vadd.f32 %v877, %v944
    %946 = vmatmul.bf16.gmra.mxu0 %v921
    %v947 = vpop.f32.mrf.mxu0
    %v948 = vadd.f32 %v877, %v947
    %v949 = vpop.f32.mrf.mxu0
    %v950 = vadd.f32 %v877, %v949
    %951 = vdwg.mxu0
    %952 = vst [vmem:[#allocation3] sm:$0xff] %v933
    %953 = vst [vmem:[#allocation3 + $0x8] sm:$0xff] %v935
    %954 = vst [vmem:[#allocation3 + $0x10] sm:$0xff] %v938
    %955 = vst [vmem:[#allocation3 + $0x18] sm:$0xff] %v940
    %956 = vst [vmem:[#allocation3 + $0x20] sm:$0xff] %v943
    %957 = vst [vmem:[#allocation3 + $0x28] sm:$0xff] %v945
    %958 = vst [vmem:[#allocation3 + $0x30] sm:$0xff] %v948
    %959 = vst [vmem:[#allocation3 + $0x38] sm:$0xff] %v950
    %v960 = vld [vmem:[#allocation11] sm:$0xf]
    %v961 = vld [vmem:[#allocation11 + $0x4] sm:$0xf]
    %v962 = vld [vmem:[#allocation11 + $0x8] sm:$0xf]
    %v963 = vld [vmem:[#allocation11 + $0xc] sm:$0xf]
    %v964 = vld [vmem:[#allocation3] sm:$0xff]
    %v969 = vunpack.c.l.b16 %v960
    %v970 = vunpack.c.l.b16 %v961
    %v971 = vunpack.c.l.b16 %v962
    %v972 = vunpack.c.l.b16 %v963
    %v973 = vpack.c.b16 %v970, %v969
    %v974 = vpack.c.b16 %v972, %v971
    %977 = vmatpush.bf16.msra.mxu0 0
    %978 = vmatpush.bf16.msra.mxu0 0
    %979 = vmatpush.bf16.msra.mxu0 0
    %980 = vmatpush.bf16.msra.mxu0 0
    %981 = vmatpush.bf16.msra.mxu0 0
    %982 = vmatpush.bf16.msra.mxu0 0
    %983 = vmatpush.bf16.msra.mxu0 %v974
    %984 = vmatpush.bf16.msra.mxu0 %v973
    %985 = vmatmul.bf16.gmra.mxu0 %v334
    %v986 = vpop.f32.mrf.mxu0
    %v987 = vadd.f32 0.0, %v986
    %v988 = vpop.f32.mrf.mxu0
    %989 = vdwg.mxu0
    %v990 = vadd.f32 %v964, %v987
    %v991 = vxor.u32 %v990, 2147483648
    %v992 = vmul.f32 %v991, 1.442695
    %v993 = vpow.pop %v992
    %v994 = vadd.f32 %v993, 1.0
    %v995 = vrcp.pop %v994
    %v996 = vmul.f32 %v994, %v995
    %v997 = vsub.f32 1.0, %v996
    %v998 = vmul.f32 %v995, %v997
    %v999 = vadd.f32 %v995, %v998
    %vm1000 = vweird.f32 %v994
    %vm1001 = vweird.f32 %v995
    %vm1002 = vmor %vm1000, %vm1001
    %v1003 = vsel %vm1002, %v995, %v999
    %v1004 = vand.u32 2147483647, %v994
    %vm1005 = vcmp.eq.f32.partialorder %v1004, 8.507059e+37
    %v1006 = vand.u32 %v994, 2147483648
    %v1007 = vor.u32 1.1754944e-38, %v1006
    %v1008 = vsel %vm1005, %v1007, %v1003
    %v1009 = vmul.f32 1.0, %v1008
    %v1010 = vtanh.pop %v990
    %v1011 = vmul.f32 %v1009, 0.0
    %1013 = vrot.lane.b32.xlu0 %v1010, 64
    %v1014 = vpop.permute.xlu0 %1013
    %v1016 = vmul.f32 %v1009, %v1014
    %1018 = vrot.lane.b32.xlu0 %v1016, 32
    %v1019 = vpop.permute.xlu0 %1018
    %v1021 = vadd.f32 %v1011, %v1019
    %v1022 = vtanh.pop %v1021
    %1024 = vrot.lane.b32.xlu0 %v1022, 64
    %v1025 = vpop.permute.xlu0 %1024
    %v1027 = vmul.f32 %v1009, %v1025
    %v1028 = vpack.c.bf16 %v1027, %v1027
    %1030 = vrot.lane.b32.xlu0 %v1028, 32
    %v1031 = vpop.permute.xlu0 %1030
    %1033 = vst.msk [vmem:[#allocation2] sm:$0xf] %vm392, %v1031
    %v1034 = vld [vmem:[%s394] sm:$0xff]
    %v1035 = vunpack.c.l.b16 %v1028
    %v1036 = vpack.c.b16 %v1035, %v1035
    %1037 = vrot.lane.b32.xlu0 %v1036, 32
    %v1038 = vpop.permute.xlu0 %1037
    %v1040 = vsel %vm332, %v1038, 0
    %1042 = vmatpush.bf16.msra.mxu0 0
    %1043 = vmatpush.bf16.msra.mxu0 0
    %1044 = vmatpush.bf16.msra.mxu0 0
    %1045 = vmatpush.bf16.msra.mxu0 0
    %1046 = vmatpush.bf16.msra.mxu0 0
    %1047 = vmatpush.bf16.msra.mxu0 0
    %1048 = vmatpush.bf16.msra.mxu0 %v974
    %1049 = vmatpush.bf16.msra.mxu0 %v973
    %1050 = vmatmul.bf16.gmra.mxu0 %v1040
    %v1051 = vpop.f32.mrf.mxu0
    %v1052 = vadd.f32 0.0, %v1051
    %v1053 = vpop.f32.mrf.mxu0
    %1054 = vdwg.mxu0
    %v1055 = vadd.f32 %v1034, %v1052
    %v1056 = vxor.u32 %v1055, 2147483648
    %v1057 = vmul.f32 %v1056, 1.442695
    %v1058 = vpow.pop %v1057
    %v1059 = vadd.f32 %v1058, 1.0
    %v1060 = vrcp.pop %v1059
    %v1061 = vmul.f32 %v1059, %v1060
    %v1062 = vsub.f32 1.0, %v1061
    %v1063 = vmul.f32 %v1060, %v1062
    %v1064 = vadd.f32 %v1060, %v1063
    %vm1065 = vweird.f32 %v1059
    %vm1066 = vweird.f32 %v1060
    %vm1067 = vmor %vm1065, %vm1066
    %v1068 = vsel %vm1067, %v1060, %v1064
    %v1069 = vand.u32 2147483647, %v1059
    %vm1070 = vcmp.eq.f32.partialorder %v1069, 8.507059e+37
    %v1071 = vand.u32 %v1059, 2147483648
    %v1072 = vor.u32 1.1754944e-38, %v1071
    %v1073 = vsel %vm1070, %v1072, %v1068
    %v1074 = vmul.f32 1.0, %v1073
    %v1075 = vtanh.pop %v1055
    %v1076 = vmul.f32 %v1074, %v1021
    %1078 = vrot.lane.b32.xlu0 %v1075, 64
    %v1079 = vpop.permute.xlu0 %1078
    %v1081 = vmul.f32 %v1074, %v1079
    %1083 = vrot.lane.b32.xlu0 %v1081, 32
    %v1084 = vpop.permute.xlu0 %1083
    %v1086 = vadd.f32 %v1076, %v1084
    %v1087 = vtanh.pop %v1086
    %1089 = vrot.lane.b32.xlu0 %v1087, 64
    %v1090 = vpop.permute.xlu0 %1089
    %v1092 = vmul.f32 %v1074, %v1090
    %v1093 = vpack.c.bf16 %v1092, %v1092
    %1095 = vrot.lane.b32.xlu0 %v1093, 32
    %v1096 = vpop.permute.xlu0 %1095
    %1098 = vst.msk [vmem:[%s459] sm:$0xf] %vm392, %v1096
    %v1099 = vld [vmem:[%s461] sm:$0xff]
    %v1100 = vunpack.c.l.b16 %v1093
    %v1101 = vpack.c.b16 %v1100, %v1100
    %1102 = vrot.lane.b32.xlu0 %v1101, 32
    %v1103 = vpop.permute.xlu0 %1102
    %v1105 = vsel %vm332, %v1103, 0
    %1107 = vmatpush.bf16.msra.mxu0 0
    %1108 = vmatpush.bf16.msra.mxu0 0
    %1109 = vmatpush.bf16.msra.mxu0 0
    %1110 = vmatpush.bf16.msra.mxu0 0
    %1111 = vmatpush.bf16.msra.mxu0 0
    %1112 = vmatpush.bf16.msra.mxu0 0
    %1113 = vmatpush.bf16.msra.mxu0 %v974
    %1114 = vmatpush.bf16.msra.mxu0 %v973
    %1115 = vmatmul.bf16.gmra.mxu0 %v1105
    %v1116 = vpop.f32.mrf.mxu0
    %v1117 = vadd.f32 0.0, %v1116
    %v1118 = vpop.f32.mrf.mxu0
    %1119 = vdwg.mxu0
    %v1120 = vadd.f32 %v1099, %v1117
    %v1121 = vxor.u32 %v1120, 2147483648
    %v1122 = vmul.f32 %v1121, 1.442695
    %v1123 = vpow.pop %v1122
    %v1124 = vadd.f32 %v1123, 1.0
    %v1125 = vrcp.pop %v1124
    %v1126 = vmul.f32 %v1124, %v1125
    %v1127 = vsub.f32 1.0, %v1126
    %v1128 = vmul.f32 %v1125, %v1127
    %v1129 = vadd.f32 %v1125, %v1128
    %vm1130 = vweird.f32 %v1124
    %vm1131 = vweird.f32 %v1125
    %vm1132 = vmor %vm1130, %vm1131
    %v1133 = vsel %vm1132, %v1125, %v1129
    %v1134 = vand.u32 2147483647, %v1124
    %vm1135 = vcmp.eq.f32.partialorder %v1134, 8.507059e+37
    %v1136 = vand.u32 %v1124, 2147483648
    %v1137 = vor.u32 1.1754944e-38, %v1136
    %v1138 = vsel %vm1135, %v1137, %v1133
    %v1139 = vmul.f32 1.0, %v1138
    %v1140 = vtanh.pop %v1120
    %v1141 = vmul.f32 %v1139, %v1086
    %1143 = vrot.lane.b32.xlu0 %v1140, 64
    %v1144 = vpop.permute.xlu0 %1143
    %v1146 = vmul.f32 %v1139, %v1144
    %1148 = vrot.lane.b32.xlu0 %v1146, 32
    %v1149 = vpop.permute.xlu0 %1148
    %v1151 = vadd.f32 %v1141, %v1149
    %v1152 = vtanh.pop %v1151
    %1154 = vrot.lane.b32.xlu0 %v1152, 64
    %v1155 = vpop.permute.xlu0 %1154
    %v1157 = vmul.f32 %v1139, %v1155
    %v1158 = vpack.c.bf16 %v1157, %v1157
    %1160 = vrot.lane.b32.xlu0 %v1158, 32
    %v1161 = vpop.permute.xlu0 %1160
    %1163 = vst.msk [vmem:[%s526] sm:$0xf] %vm392, %v1161
    %v1164 = vld [vmem:[%s528] sm:$0xff]
    %v1165 = vunpack.c.l.b16 %v1158
    %v1166 = vpack.c.b16 %v1165, %v1165
    %1167 = vrot.lane.b32.xlu0 %v1166, 32
    %v1168 = vpop.permute.xlu0 %1167
    %v1170 = vsel %vm332, %v1168, 0
    %1172 = vmatpush.bf16.msra.mxu0 0
    %1173 = vmatpush.bf16.msra.mxu0 0
    %1174 = vmatpush.bf16.msra.mxu0 0
    %1175 = vmatpush.bf16.msra.mxu0 0
    %1176 = vmatpush.bf16.msra.mxu0 0
    %1177 = vmatpush.bf16.msra.mxu0 0
    %1178 = vmatpush.bf16.msra.mxu0 %v974
    %1179 = vmatpush.bf16.msra.mxu0 %v973
    %1180 = vmatmul.bf16.gmra.mxu0 %v1170
    %v1181 = vpop.f32.mrf.mxu0
    %v1182 = vadd.f32 0.0, %v1181
    %v1183 = vpop.f32.mrf.mxu0
    %1184 = vdwg.mxu0
    %v1185 = vadd.f32 %v1164, %v1182
    %v1186 = vxor.u32 %v1185, 2147483648
    %v1187 = vmul.f32 %v1186, 1.442695
    %v1188 = vpow.pop %v1187
    %v1189 = vadd.f32 %v1188, 1.0
    %v1190 = vrcp.pop %v1189
    %v1191 = vmul.f32 %v1189, %v1190
    %v1192 = vsub.f32 1.0, %v1191
    %v1193 = vmul.f32 %v1190, %v1192
    %v1194 = vadd.f32 %v1190, %v1193
    %vm1195 = vweird.f32 %v1189
    %vm1196 = vweird.f32 %v1190
    %vm1197 = vmor %vm1195, %vm1196
    %v1198 = vsel %vm1197, %v1190, %v1194
    %v1199 = vand.u32 2147483647, %v1189
    %vm1200 = vcmp.eq.f32.partialorder %v1199, 8.507059e+37
    %v1201 = vand.u32 %v1189, 2147483648
    %v1202 = vor.u32 1.1754944e-38, %v1201
    %v1203 = vsel %vm1200, %v1202, %v1198
    %v1204 = vmul.f32 1.0, %v1203
    %v1205 = vtanh.pop %v1185
    %v1206 = vmul.f32 %v1204, %v1151
    %1208 = vrot.lane.b32.xlu0 %v1205, 64
    %v1209 = vpop.permute.xlu0 %1208
    %v1211 = vmul.f32 %v1204, %v1209
    %1213 = vrot.lane.b32.xlu0 %v1211, 32
    %v1214 = vpop.permute.xlu0 %1213
    %v1216 = vadd.f32 %v1206, %v1214
    %v1217 = vtanh.pop %v1216
    %1219 = vrot.lane.b32.xlu0 %v1217, 64
    %v1220 = vpop.permute.xlu0 %1219
    %v1222 = vmul.f32 %v1204, %v1220
    %v1223 = vpack.c.bf16 %v1222, %v1222
    %1225 = vrot.lane.b32.xlu0 %v1223, 32
    %v1226 = vpop.permute.xlu0 %1225
    %1228 = vst.msk [vmem:[%s593] sm:$0xf] %vm392, %v1226
    %v1229 = vld [vmem:[%s595] sm:$0xff]
    %v1230 = vunpack.c.l.b16 %v1223
    %v1231 = vpack.c.b16 %v1230, %v1230
    %1232 = vrot.lane.b32.xlu0 %v1231, 32
    %v1233 = vpop.permute.xlu0 %1232
    %v1235 = vsel %vm332, %v1233, 0
    %1237 = vmatpush.bf16.msra.mxu0 0
    %1238 = vmatpush.bf16.msra.mxu0 0
    %1239 = vmatpush.bf16.msra.mxu0 0
    %1240 = vmatpush.bf16.msra.mxu0 0
    %1241 = vmatpush.bf16.msra.mxu0 0
    %1242 = vmatpush.bf16.msra.mxu0 0
    %1243 = vmatpush.bf16.msra.mxu0 %v974
    %1244 = vmatpush.bf16.msra.mxu0 %v973
    %1245 = vmatmul.bf16.gmra.mxu0 %v1235
    %v1246 = vpop.f32.mrf.mxu0
    %v1247 = vadd.f32 0.0, %v1246
    %v1248 = vpop.f32.mrf.mxu0
    %1249 = vdwg.mxu0
    %v1250 = vadd.f32 %v1229, %v1247
    %v1251 = vxor.u32 %v1250, 2147483648
    %v1252 = vmul.f32 %v1251, 1.442695
    %v1253 = vpow.pop %v1252
    %v1254 = vadd.f32 %v1253, 1.0
    %v1255 = vrcp.pop %v1254
    %v1256 = vmul.f32 %v1254, %v1255
    %v1257 = vsub.f32 1.0, %v1256
    %v1258 = vmul.f32 %v1255, %v1257
    %v1259 = vadd.f32 %v1255, %v1258
    %vm1260 = vweird.f32 %v1254
    %vm1261 = vweird.f32 %v1255
    %vm1262 = vmor %vm1260, %vm1261
    %v1263 = vsel %vm1262, %v1255, %v1259
    %v1264 = vand.u32 2147483647, %v1254
    %vm1265 = vcmp.eq.f32.partialorder %v1264, 8.507059e+37
    %v1266 = vand.u32 %v1254, 2147483648
    %v1267 = vor.u32 1.1754944e-38, %v1266
    %v1268 = vsel %vm1265, %v1267, %v1263
    %v1269 = vmul.f32 1.0, %v1268
    %v1270 = vtanh.pop %v1250
    %v1271 = vmul.f32 %v1269, %v1216
    %1273 = vrot.lane.b32.xlu0 %v1270, 64
    %v1274 = vpop.permute.xlu0 %1273
    %v1276 = vmul.f32 %v1269, %v1274
    %1278 = vrot.lane.b32.xlu0 %v1276, 32
    %v1279 = vpop.permute.xlu0 %1278
    %v1281 = vadd.f32 %v1271, %v1279
    %v1282 = vtanh.pop %v1281
    %1284 = vrot.lane.b32.xlu0 %v1282, 64
    %v1285 = vpop.permute.xlu0 %1284
    %v1287 = vmul.f32 %v1269, %v1285
    %v1288 = vpack.c.bf16 %v1287, %v1287
    %1290 = vrot.lane.b32.xlu0 %v1288, 32
    %v1291 = vpop.permute.xlu0 %1290
    %1293 = vst.msk [vmem:[%s660] sm:$0xf] %vm392, %v1291
    %v1294 = vld [vmem:[%s662] sm:$0xff]
    %v1295 = vunpack.c.l.b16 %v1288
    %v1296 = vpack.c.b16 %v1295, %v1295
    %1297 = vrot.lane.b32.xlu0 %v1296, 32
    %v1298 = vpop.permute.xlu0 %1297
    %v1300 = vsel %vm332, %v1298, 0
    %1302 = vmatpush.bf16.msra.mxu0 0
    %1303 = vmatpush.bf16.msra.mxu0 0
    %1304 = vmatpush.bf16.msra.mxu0 0
    %1305 = vmatpush.bf16.msra.mxu0 0
    %1306 = vmatpush.bf16.msra.mxu0 0
    %1307 = vmatpush.bf16.msra.mxu0 0
    %1308 = vmatpush.bf16.msra.mxu0 %v974
    %1309 = vmatpush.bf16.msra.mxu0 %v973
    %1310 = vmatmul.bf16.gmra.mxu0 %v1300
    %v1311 = vpop.f32.mrf.mxu0
    %v1312 = vadd.f32 0.0, %v1311
    %v1313 = vpop.f32.mrf.mxu0
    %1314 = vdwg.mxu0
    %v1315 = vadd.f32 %v1294, %v1312
    %v1316 = vxor.u32 %v1315, 2147483648
    %v1317 = vmul.f32 %v1316, 1.442695
    %v1318 = vpow.pop %v1317
    %v1319 = vadd.f32 %v1318, 1.0
    %v1320 = vrcp.pop %v1319
    %v1321 = vmul.f32 %v1319, %v1320
    %v1322 = vsub.f32 1.0, %v1321
    %v1323 = vmul.f32 %v1320, %v1322
    %v1324 = vadd.f32 %v1320, %v1323
    %vm1325 = vweird.f32 %v1319
    %vm1326 = vweird.f32 %v1320
    %vm1327 = vmor %vm1325, %vm1326
    %v1328 = vsel %vm1327, %v1320, %v1324
    %v1329 = vand.u32 2147483647, %v1319
    %vm1330 = vcmp.eq.f32.partialorder %v1329, 8.507059e+37
    %v1331 = vand.u32 %v1319, 2147483648
    %v1332 = vor.u32 1.1754944e-38, %v1331
    %v1333 = vsel %vm1330, %v1332, %v1328
    %v1334 = vmul.f32 1.0, %v1333
    %v1335 = vtanh.pop %v1315
    %v1336 = vmul.f32 %v1334, %v1281
    %1338 = vrot.lane.b32.xlu0 %v1335, 64
    %v1339 = vpop.permute.xlu0 %1338
    %v1341 = vmul.f32 %v1334, %v1339
    %1343 = vrot.lane.b32.xlu0 %v1341, 32
    %v1344 = vpop.permute.xlu0 %1343
    %v1346 = vadd.f32 %v1336, %v1344
    %v1347 = vtanh.pop %v1346
    %1349 = vrot.lane.b32.xlu0 %v1347, 64
    %v1350 = vpop.permute.xlu0 %1349
    %v1352 = vmul.f32 %v1334, %v1350
    %v1353 = vpack.c.bf16 %v1352, %v1352
    %1355 = vrot.lane.b32.xlu0 %v1353, 32
    %v1356 = vpop.permute.xlu0 %1355
    %1358 = vst.msk [vmem:[%s727] sm:$0xf] %vm392, %v1356
    %v1359 = vld [vmem:[%s729] sm:$0xff]
    %v1360 = vunpack.c.l.b16 %v1353
    %v1361 = vpack.c.b16 %v1360, %v1360
    %1362 = vrot.lane.b32.xlu0 %v1361, 32
    %v1363 = vpop.permute.xlu0 %1362
    %v1365 = vsel %vm332, %v1363, 0
    %1367 = vmatpush.bf16.msra.mxu0 0
    %1368 = vmatpush.bf16.msra.mxu0 0
    %1369 = vmatpush.bf16.msra.mxu0 0
    %1370 = vmatpush.bf16.msra.mxu0 0
    %1371 = vmatpush.bf16.msra.mxu0 0
    %1372 = vmatpush.bf16.msra.mxu0 0
    %1373 = vmatpush.bf16.msra.mxu0 %v974
    %1374 = vmatpush.bf16.msra.mxu0 %v973
    %1375 = vmatmul.bf16.gmra.mxu0 %v1365
    %v1376 = vpop.f32.mrf.mxu0
    %v1377 = vadd.f32 0.0, %v1376
    %v1378 = vpop.f32.mrf.mxu0
    %1379 = vdwg.mxu0
    %v1380 = vadd.f32 %v1359, %v1377
    %v1381 = vxor.u32 %v1380, 2147483648
    %v1382 = vmul.f32 %v1381, 1.442695
    %v1383 = vpow.pop %v1382
    %v1384 = vadd.f32 %v1383, 1.0
    %v1385 = vrcp.pop %v1384
    %v1386 = vmul.f32 %v1384, %v1385
    %v1387 = vsub.f32 1.0, %v1386
    %v1388 = vmul.f32 %v1385, %v1387
    %v1389 = vadd.f32 %v1385, %v1388
    %vm1390 = vweird.f32 %v1384
    %vm1391 = vweird.f32 %v1385
    %vm1392 = vmor %vm1390, %vm1391
    %v1393 = vsel %vm1392, %v1385, %v1389
    %v1394 = vand.u32 2147483647, %v1384
    %vm1395 = vcmp.eq.f32.partialorder %v1394, 8.507059e+37
    %v1396 = vand.u32 %v1384, 2147483648
    %v1397 = vor.u32 1.1754944e-38, %v1396
    %v1398 = vsel %vm1395, %v1397, %v1393
    %v1399 = vmul.f32 1.0, %v1398
    %v1400 = vtanh.pop %v1380
    %v1401 = vmul.f32 %v1399, %v1346
    %1403 = vrot.lane.b32.xlu0 %v1400, 64
    %v1404 = vpop.permute.xlu0 %1403
    %v1406 = vmul.f32 %v1399, %v1404
    %1408 = vrot.lane.b32.xlu0 %v1406, 32
    %v1409 = vpop.permute.xlu0 %1408
    %v1411 = vadd.f32 %v1401, %v1409
    %v1412 = vtanh.pop %v1411
    %1414 = vrot.lane.b32.xlu0 %v1412, 64
    %v1415 = vpop.permute.xlu0 %1414
    %v1417 = vmul.f32 %v1399, %v1415
    %v1418 = vpack.c.bf16 %v1417, %v1417
    %1420 = vrot.lane.b32.xlu0 %v1418, 32
    %v1421 = vpop.permute.xlu0 %1420
    %1423 = vst.msk [vmem:[%s794] sm:$0xf] %vm392, %v1421
    %v1424 = vld [vmem:[%s796] sm:$0xff]
    %v1425 = vunpack.c.l.b16 %v1418
    %v1426 = vpack.c.b16 %v1425, %v1425
    %1427 = vrot.lane.b32.xlu0 %v1426, 32
    %v1428 = vpop.permute.xlu0 %1427
    %v1430 = vsel %vm332, %v1428, 0
    %1432 = vmatpush.bf16.msra.mxu0 0
    %1433 = vmatpush.bf16.msra.mxu0 0
    %1434 = vmatpush.bf16.msra.mxu0 0
    %1435 = vmatpush.bf16.msra.mxu0 0
    %1436 = vmatpush.bf16.msra.mxu0 0
    %1437 = vmatpush.bf16.msra.mxu0 0
    %1438 = vmatpush.bf16.msra.mxu0 %v974
    %1439 = vmatpush.bf16.msra.mxu0 %v973
    %1440 = vmatmul.bf16.gmra.mxu0 %v1430
    %v1441 = vpop.f32.mrf.mxu0
    %v1442 = vadd.f32 0.0, %v1441
    %v1443 = vpop.f32.mrf.mxu0
    %1444 = vdwg.mxu0
    %v1445 = vadd.f32 %v1424, %v1442
    %v1446 = vxor.u32 %v1445, 2147483648
    %v1447 = vmul.f32 %v1446, 1.442695
    %v1448 = vpow.pop %v1447
    %v1449 = vadd.f32 %v1448, 1.0
    %v1450 = vrcp.pop %v1449
    %v1451 = vmul.f32 %v1449, %v1450
    %v1452 = vsub.f32 1.0, %v1451
    %v1453 = vmul.f32 %v1450, %v1452
    %v1454 = vadd.f32 %v1450, %v1453
    %vm1455 = vweird.f32 %v1449
    %vm1456 = vweird.f32 %v1450
    %vm1457 = vmor %vm1455, %vm1456
    %v1458 = vsel %vm1457, %v1450, %v1454
    %v1459 = vand.u32 2147483647, %v1449
    %vm1460 = vcmp.eq.f32.partialorder %v1459, 8.507059e+37
    %v1461 = vand.u32 %v1449, 2147483648
    %v1462 = vor.u32 1.1754944e-38, %v1461
    %v1463 = vsel %vm1460, %v1462, %v1458
    %v1464 = vmul.f32 1.0, %v1463
    %v1465 = vtanh.pop %v1445
    %v1466 = vmul.f32 %v1464, %v1411
    %1468 = vrot.lane.b32.xlu0 %v1465, 64
    %v1469 = vpop.permute.xlu0 %1468
    %v1471 = vmul.f32 %v1464, %v1469
    %1473 = vrot.lane.b32.xlu0 %v1471, 32
    %v1474 = vpop.permute.xlu0 %1473
    %v1476 = vadd.f32 %v1466, %v1474
    %v1477 = vtanh.pop %v1476
    %1479 = vrot.lane.b32.xlu0 %v1477, 64
    %v1480 = vpop.permute.xlu0 %1479
    %v1482 = vmul.f32 %v1464, %v1480
    %v1483 = vpack.c.bf16 %v1482, %v1482
    %1485 = vrot.lane.b32.xlu0 %v1483, 32
    %v1486 = vpop.permute.xlu0 %1485
    %1488 = vst.msk [vmem:[%s861] sm:$0xf] %vm392, %v1486
    %v1489 = vld [vmem:[#allocation2] sm:$0xf]
    %v1490 = vld [vmem:[#allocation2 + $0x4] sm:$0xf]
    %v1491 = vld [vmem:[#allocation2 + $0x8] sm:$0xf]
    %v1492 = vld [vmem:[#allocation2 + $0xc] sm:$0xf]
    %v1493 = vld [vmem:[#allocation2 + $0x10] sm:$0xf]
    %v1494 = vld [vmem:[#allocation2 + $0x14] sm:$0xf]
    %v1495 = vld [vmem:[#allocation2 + $0x18] sm:$0xf]
    %v1496 = vld [vmem:[#allocation2 + $0x1c] sm:$0xf]
    %v1497 = vld [vmem:[#allocation14] sm:$0xf]
    %v1498 = vld [vmem:[#allocation14 + $0x4] sm:$0xf]
    %v1499 = vld [vmem:[#allocation14 + $0x8] sm:$0xf]
    %v1500 = vld [vmem:[#allocation14 + $0xc] sm:$0xf]
    %v1501 = vld [vmem:[#allocation17] sm:$0x1]
    %v1503 = vperm.slane %v1501, 0
    %v1509 = vunpack.c.l.b16 %v1497
    %v1510 = vunpack.c.l.b16 %v1498
    %v1511 = vunpack.c.l.b16 %v1499
    %v1512 = vunpack.c.l.b16 %v1500
    %v1513 = vpack.c.b16 %v1510, %v1509
    %v1514 = vpack.c.b16 %v1512, %v1511
    %v1518 = vsel %vm332, %v1496, 0
    %1520 = vmatpush.bf16.msra.mxu0 0
    %1521 = vmatpush.bf16.msra.mxu0 0
    %1522 = vmatpush.bf16.msra.mxu0 0
    %1523 = vmatpush.bf16.msra.mxu0 0
    %1524 = vmatpush.bf16.msra.mxu0 0
    %1525 = vmatpush.bf16.msra.mxu0 0
    %1526 = vmatpush.bf16.msra.mxu0 %v1514
    %1527 = vmatpush.bf16.msra.mxu0 %v1513
    %1528 = vmatmul.bf16.gmra.mxu0 %v1518
    %v1529 = vpop.f32.mrf.mxu0
    %v1530 = vadd.f32 %v1503, %v1529
    %v1531 = vpop.f32.mrf.mxu0
    %1532 = vdwg.mxu0
    %v1533 = vmul.f32 %v1530, 0.35355338
    %v1534 = vld [vmem:[#allocation15] sm:$0xf]
    %v1535 = vld [vmem:[#allocation15 + $0x4] sm:$0xf]
    %v1536 = vld [vmem:[#allocation15 + $0x8] sm:$0xf]
    %v1537 = vld [vmem:[#allocation15 + $0xc] sm:$0xf]
    %v1538 = vld [vmem:[#allocation18] sm:$0x1]
    %v1540 = vperm.slane %v1538, 0
    %v1550 = vunpack.c.l.b16 %v1489
    %v1551 = vunpack.c.l.b16 %v1490
    %v1552 = vunpack.c.l.b16 %v1491
    %v1553 = vunpack.c.l.b16 %v1492
    %v1554 = vunpack.c.l.b16 %v1493
    %v1555 = vunpack.c.l.b16 %v1494
    %v1556 = vunpack.c.l.b16 %v1495
    %v1557 = vunpack.c.l.b16 %v1496
    %v1558 = vpack.c.b16 %v1551, %v1550
    %v1559 = vpack.c.b16 %v1553, %v1552
    %v1560 = vpack.c.b16 %v1555, %v1554
    %v1561 = vpack.c.b16 %v1557, %v1556
    %v1566 = vunpack.c.l.b16 %v1534
    %v1567 = vunpack.c.l.b16 %v1535
    %v1568 = vunpack.c.l.b16 %v1536
    %v1569 = vunpack.c.l.b16 %v1537
    %v1570 = vpack.c.b16 %v1567, %v1566
    %v1571 = vpack.c.b16 %v1569, %v1568
    %v1575 = vsel %vm332, %v1558, 0
    %v1578 = vsel %vm332, %v1559, 0
    %v1581 = vsel %vm332, %v1560, 0
    %v1584 = vsel %vm332, %v1561, 0
    %1586 = vmatpush.bf16.msra.mxu0 0
    %1587 = vmatpush.bf16.msra.mxu0 0
    %1588 = vmatpush.bf16.msra.mxu0 0
    %1589 = vmatpush.bf16.msra.mxu0 0
    %1590 = vmatpush.bf16.msra.mxu0 0
    %1591 = vmatpush.bf16.msra.mxu0 0
    %1592 = vmatpush.bf16.msra.mxu0 %v1571
    %1593 = vmatpush.bf16.msra.mxu0 %v1570
    %1594 = vmatmul.bf16.gmra.mxu0 %v1575
    %v1595 = vpop.f32.mrf.mxu0
    %v1596 = vadd.f32 %v1540, %v1595
    %v1597 = vpop.f32.mrf.mxu0
    %v1598 = vadd.f32 %v1540, %v1597
    %1599 = vmatmul.bf16.gmra.mxu0 %v1578
    %v1600 = vpop.f32.mrf.mxu0
    %v1601 = vadd.f32 %v1540, %v1600
    %v1602 = vpop.f32.mrf.mxu0
    %v1603 = vadd.f32 %v1540, %v1602
    %1604 = vmatmul.bf16.gmra.mxu0 %v1581
    %v1605 = vpop.f32.mrf.mxu0
    %v1606 = vadd.f32 %v1540, %v1605
    %v1607 = vpop.f32.mrf.mxu0
    %v1608 = vadd.f32 %v1540, %v1607
    %1609 = vmatmul.bf16.gmra.mxu0 %v1584
    %v1610 = vpop.f32.mrf.mxu0
    %v1611 = vadd.f32 %v1540, %v1610
    %v1612 = vpop.f32.mrf.mxu0
    %v1613 = vadd.f32 %v1540, %v1612
    %1614 = vdwg.mxu0
    %v1615 = vld [vmem:[%s9] sm:$0xf]
    %v1616 = vld [vmem:[%s9 + $0x4] sm:$0xf]
    %v1617 = vld [vmem:[%s9 + $0x8] sm:$0xf]
    %v1618 = vld [vmem:[%s9 + $0xc] sm:$0xf]
    %v1619 = vld [vmem:[%s12] sm:$0x1]
    %v1621 = vperm.slane %v1619, 0
    %v1627 = vunpack.c.l.b16 %v1615
    %v1628 = vunpack.c.l.b16 %v1616
    %v1629 = vunpack.c.l.b16 %v1617
    %v1630 = vunpack.c.l.b16 %v1618
    %v1631 = vpack.c.b16 %v1628, %v1627
    %v1632 = vpack.c.b16 %v1630, %v1629
    %1635 = vmatpush.bf16.msra.mxu0 0
    %1636 = vmatpush.bf16.msra.mxu0 0
    %1637 = vmatpush.bf16.msra.mxu0 0
    %1638 = vmatpush.bf16.msra.mxu0 0
    %1639 = vmatpush.bf16.msra.mxu0 0
    %1640 = vmatpush.bf16.msra.mxu0 0
    %1641 = vmatpush.bf16.msra.mxu0 %v1632
    %1642 = vmatpush.bf16.msra.mxu0 %v1631
    %1643 = vmatmul.bf16.gmra.mxu0 %v1575
    %v1644 = vpop.f32.mrf.mxu0
    %v1645 = vadd.f32 %v1621, %v1644
    %v1646 = vpop.f32.mrf.mxu0
    %v1647 = vadd.f32 %v1621, %v1646
    %1648 = vmatmul.bf16.gmra.mxu0 %v1578
    %v1649 = vpop.f32.mrf.mxu0
    %v1650 = vadd.f32 %v1621, %v1649
    %v1651 = vpop.f32.mrf.mxu0
    %v1652 = vadd.f32 %v1621, %v1651
    %1653 = vmatmul.bf16.gmra.mxu0 %v1581
    %v1654 = vpop.f32.mrf.mxu0
    %v1655 = vadd.f32 %v1621, %v1654
    %v1656 = vpop.f32.mrf.mxu0
    %v1657 = vadd.f32 %v1621, %v1656
    %1658 = vmatmul.bf16.gmra.mxu0 %v1584
    %v1659 = vpop.f32.mrf.mxu0
    %v1660 = vadd.f32 %v1621, %v1659
    %v1661 = vpop.f32.mrf.mxu0
    %v1662 = vadd.f32 %v1621, %v1661
    %1663 = vdwg.mxu0
    %v1664 = vmul.f32 %v1596, %v1533
    %v1665 = vmul.f32 %v1598, %v1533
    %v1666 = vmul.f32 %v1601, %v1533
    %v1667 = vmul.f32 %v1603, %v1533
    %v1668 = vmul.f32 %v1606, %v1533
    %v1669 = vmul.f32 %v1608, %v1533
    %v1670 = vmul.f32 %v1611, %v1533
    %v1671 = vmul.f32 %v1613, %v1533
    %v1672 = vld [vmem:[%s19] sm:$0xff]
    %v1673 = vld [vmem:[%s19 + $0x8] sm:$0xff]
    %v1674 = vld [vmem:[%s19 + $0x10] sm:$0xff]
    %v1675 = vld [vmem:[%s19 + $0x18] sm:$0xff]
    %v1677 = vsel %vm332, %v1664, 0
    %v1680 = vsel %vm332, %v1665, 0
    %v1683 = vsel %vm332, %v1666, 0
    %v1686 = vsel %vm332, %v1667, 0
    %v1689 = vsel %vm332, %v1668, 0
    %v1692 = vsel %vm332, %v1669, 0
    %v1695 = vsel %vm332, %v1670, 0
    %v1698 = vsel %vm332, %v1671, 0
    %1700 = vmatpush.msra.mxu0 0.0
    %1701 = vmatpush.msra.mxu0 0.0
    %1702 = vmatpush.msra.mxu0 0.0
    %1703 = vmatpush.msra.mxu0 0.0
    %1704 = vmatpush.msra.mxu0 0.0
    %1705 = vmatpush.msra.mxu0 0.0
    %1706 = vmatpush.msra.mxu0 0.0
    %1707 = vmatpush.msra.mxu0 0.0
    %1708 = vmatpush.msra.mxu0 0.0
    %1709 = vmatpush.msra.mxu0 0.0
    %1710 = vmatpush.msra.mxu0 0.0
    %1711 = vmatpush.msra.mxu0 0.0
    %1712 = vmatpush.msra.mxu0 %v1675
    %1713 = vmatpush.msra.mxu0 %v1674
    %1714 = vmatpush.msra.mxu0 %v1673
    %1715 = vmatpush.msra.mxu0 %v1672
    %1716 = vmatmul.f32.gmra.mxu0 %v1677
    %v1717 = vpop.f32.mrf.mxu0
    %v1718 = vadd.f32 0.0, %v1717
    %1719 = vmatmul.f32.gmra.mxu0 %v1680
    %v1720 = vpop.f32.mrf.mxu0
    %v1721 = vadd.f32 0.0, %v1720
    %1722 = vmatmul.f32.gmra.mxu0 %v1683
    %v1723 = vpop.f32.mrf.mxu0
    %v1724 = vadd.f32 0.0, %v1723
    %1725 = vmatmul.f32.gmra.mxu0 %v1686
    %v1726 = vpop.f32.mrf.mxu0
    %v1727 = vadd.f32 0.0, %v1726
    %1728 = vmatmul.f32.gmra.mxu0 %v1689
    %v1729 = vpop.f32.mrf.mxu0
    %v1730 = vadd.f32 0.0, %v1729
    %1731 = vmatmul.f32.gmra.mxu0 %v1692
    %v1732 = vpop.f32.mrf.mxu0
    %v1733 = vadd.f32 0.0, %v1732
    %1734 = vmatmul.f32.gmra.mxu0 %v1695
    %v1735 = vpop.f32.mrf.mxu0
    %v1736 = vadd.f32 0.0, %v1735
    %1737 = vmatmul.f32.gmra.mxu0 %v1698
    %v1738 = vpop.f32.mrf.mxu0
    %v1739 = vadd.f32 0.0, %v1738
    %1740 = vdwg.mxu0
    %vm1741 = vcmask 31744
    %v1742 = vsel %vm1741, %v1718, -inf
    %v1743 = vsel %vm1741, %v1721, -inf
    %v1744 = vsel %vm1741, %v1724, -inf
    %v1745 = vsel %vm1741, %v1727, -inf
    %v1746 = vsel %vm1741, %v1730, -inf
    %v1747 = vmax.f32 %v1742, %v1746
    %v1748 = vsel %vm1741, %v1733, -inf
    %v1749 = vmax.f32 %v1743, %v1748
    %v1750 = vsel %vm1741, %v1736, -inf
    %v1751 = vmax.f32 %v1744, %v1750
    %v1752 = vsel %vm1741, %v1739, -inf
    %v1753 = vmax.f32 %v1745, %v1752
    %v1754 = vmax.f32 %v1747, %v1749
    %v1755 = vmax.f32 %v1751, %v1753
    %v1756 = vmax.f32 %v1754, %v1755
    %v1757 = vsub.f32 %v1718, %v1756
    %v1758 = vsub.f32 %v1721, %v1756
    %v1759 = vsub.f32 %v1724, %v1756
    %v1760 = vsub.f32 %v1727, %v1756
    %v1761 = vsub.f32 %v1730, %v1756
    %v1762 = vsub.f32 %v1733, %v1756
    %v1763 = vsub.f32 %v1736, %v1756
    %v1764 = vsub.f32 %v1739, %v1756
    %v1765 = vmul.f32 %v1757, 1.442695
    %v1766 = vpow.pop %v1765
    %v1767 = vmul.f32 %v1758, 1.442695
    %v1768 = vpow.pop %v1767
    %v1769 = vmul.f32 %v1759, 1.442695
    %v1770 = vpow.pop %v1769
    %v1771 = vmul.f32 %v1760, 1.442695
    %v1772 = vpow.pop %v1771
    %v1773 = vmul.f32 %v1761, 1.442695
    %v1774 = vpow.pop %v1773
    %v1775 = vmul.f32 %v1762, 1.442695
    %v1776 = vpow.pop %v1775
    %v1777 = vmul.f32 %v1763, 1.442695
    %v1778 = vpow.pop %v1777
    %v1779 = vmul.f32 %v1764, 1.442695
    %v1780 = vpow.pop %v1779
    %v1781 = vsel %vm1741, %v1766, 0.0
    %v1782 = vsel %vm1741, %v1768, 0.0
    %v1783 = vadd.f32 %v1781, %v1782
    %v1784 = vsel %vm1741, %v1770, 0.0
    %v1785 = vadd.f32 %v1783, %v1784
    %v1786 = vsel %vm1741, %v1772, 0.0
    %v1787 = vadd.f32 %v1785, %v1786
    %v1788 = vsel %vm1741, %v1774, 0.0
    %v1789 = vadd.f32 %v1787, %v1788
    %v1790 = vsel %vm1741, %v1776, 0.0
    %v1791 = vadd.f32 %v1789, %v1790
    %v1792 = vsel %vm1741, %v1778, 0.0
    %v1793 = vadd.f32 %v1791, %v1792
    %v1794 = vsel %vm1741, %v1780, 0.0
    %v1795 = vadd.f32 %v1793, %v1794
    %v1796 = vrcp.pop %v1795
    %v1797 = vmul.f32 %v1766, %v1796
    %v1798 = vmul.f32 %v1768, %v1796
    %v1799 = vmul.f32 %v1770, %v1796
    %v1800 = vmul.f32 %v1772, %v1796
    %v1801 = vmul.f32 %v1774, %v1796
    %v1802 = vmul.f32 %v1776, %v1796
    %v1803 = vmul.f32 %v1778, %v1796
    %v1804 = vmul.f32 %v1780, %v1796
    %v1805 = vld [vmem:[#allocation20] sm:$0xf]
    %v1807 = vsel %vm1741, %v1797, 0
    %v1810 = vsel %vm1741, %v1798, 0
    %v1813 = vsel %vm1741, %v1799, 0
    %v1816 = vsel %vm1741, %v1800, 0
    %v1819 = vsel %vm1741, %v1801, 0
    %v1822 = vsel %vm1741, %v1802, 0
    %v1825 = vsel %vm1741, %v1803, 0
    %v1828 = vsel %vm1741, %v1804, 0
    %v1831 = vsel %vm274, %v1805, 0
    %1833 = vmatpush.msra.mxu0 0.0
    %1834 = vmatpush.msra.mxu0 0.0
    %1835 = vmatpush.msra.mxu0 0.0
    %1836 = vmatpush.msra.mxu0 0.0
    %1837 = vmatpush.msra.mxu0 0.0
    %1838 = vmatpush.msra.mxu0 0.0
    %1839 = vmatpush.msra.mxu0 0.0
    %1840 = vmatpush.msra.mxu0 0.0
    %1841 = vmatpush.msra.mxu0 0.0
    %1842 = vmatpush.msra.mxu0 0.0
    %1843 = vmatpush.msra.mxu0 0.0
    %1844 = vmatpush.msra.mxu0 0.0
    %1845 = vmatpush.msra.mxu0 0.0
    %1846 = vmatpush.msra.mxu0 0.0
    %1847 = vmatpush.msra.mxu0 0.0
    %1848 = vmatpush.msra.mxu0 %v1831
    %1849 = vmatmul.f32.gmra.mxu0 %v1807
    %v1850 = vpop.f32.mrf.mxu0
    %v1851 = vadd.f32 0.0, %v1850
    %1852 = vmatmul.f32.gmra.mxu0 %v1810
    %v1853 = vpop.f32.mrf.mxu0
    %v1854 = vadd.f32 0.0, %v1853
    %1855 = vmatmul.f32.gmra.mxu0 %v1813
    %v1856 = vpop.f32.mrf.mxu0
    %v1857 = vadd.f32 0.0, %v1856
    %1858 = vmatmul.f32.gmra.mxu0 %v1816
    %v1859 = vpop.f32.mrf.mxu0
    %v1860 = vadd.f32 0.0, %v1859
    %1861 = vmatmul.f32.gmra.mxu0 %v1819
    %v1862 = vpop.f32.mrf.mxu0
    %v1863 = vadd.f32 0.0, %v1862
    %1864 = vmatmul.f32.gmra.mxu0 %v1822
    %v1865 = vpop.f32.mrf.mxu0
    %v1866 = vadd.f32 0.0, %v1865
    %1867 = vmatmul.f32.gmra.mxu0 %v1825
    %v1868 = vpop.f32.mrf.mxu0
    %v1869 = vadd.f32 0.0, %v1868
    %1870 = vmatmul.f32.gmra.mxu0 %v1828
    %v1871 = vpop.f32.mrf.mxu0
    %v1872 = vadd.f32 0.0, %v1871
    %1873 = vdwg.mxu0
    %v1874 = vmul.f32 %v1851, %v1645
    %v1875 = vmul.f32 %v1854, %v1647
    %v1876 = vmul.f32 %v1857, %v1650
    %v1877 = vmul.f32 %v1860, %v1652
    %v1878 = vmul.f32 %v1863, %v1655
    %v1879 = vmul.f32 %v1866, %v1657
    %v1880 = vmul.f32 %v1869, %v1660
    %v1881 = vmul.f32 %v1872, %v1662
    %v1882 = vsel %vm332, %v1874, 0.0
    %v1883 = vsel %vm332, %v1875, 0.0
    %v1884 = vadd.f32 %v1882, %v1883
    %v1885 = vsel %vm332, %v1876, 0.0
    %v1886 = vadd.f32 %v1884, %v1885
    %v1887 = vsel %vm332, %v1877, 0.0
    %v1888 = vadd.f32 %v1886, %v1887
    %v1889 = vsel %vm332, %v1878, 0.0
    %v1890 = vadd.f32 %v1888, %v1889
    %v1891 = vsel %vm332, %v1879, 0.0
    %v1892 = vadd.f32 %v1890, %v1891
    %v1893 = vsel %vm332, %v1880, 0.0
    %v1894 = vadd.f32 %v1892, %v1893
    %v1895 = vsel %vm332, %v1881, 0.0
    %v1896 = vadd.f32 %v1894, %v1895
    %v1897 = vpack.c.bf16 %v1896, %v1896
    %v1898 = vld [vmem:[%s13] sm:$0xf]
    %v1899 = vld [vmem:[%s13 + $0x4] sm:$0xf]
    %v1900 = vld [vmem:[%s13 + $0x8] sm:$0xf]
    %v1901 = vld [vmem:[%s13 + $0xc] sm:$0xf]
    %v1902 = vld [vmem:[%s14] sm:$0x1]
    %v1904 = vperm.slane %v1902, 0
    %v1910 = vunpack.c.l.b16 %v1898
    %v1911 = vunpack.c.l.b16 %v1899
    %v1912 = vunpack.c.l.b16 %v1900
    %v1913 = vunpack.c.l.b16 %v1901
    %v1914 = vpack.c.b16 %v1911, %v1910
    %v1915 = vpack.c.b16 %v1913, %v1912
    %v1919 = vsel %vm332, %v1897, 0
    %1921 = vmatpush.bf16.msra.mxu0 0
    %1922 = vmatpush.bf16.msra.mxu0 0
    %1923 = vmatpush.bf16.msra.mxu0 0
    %1924 = vmatpush.bf16.msra.mxu0 0
    %1925 = vmatpush.bf16.msra.mxu0 0
    %1926 = vmatpush.bf16.msra.mxu0 0
    %1927 = vmatpush.bf16.msra.mxu0 %v1915
    %1928 = vmatpush.bf16.msra.mxu0 %v1914
    %1929 = vmatmul.bf16.gmra.mxu0 %v1919
    %v1930 = vpop.f32.mrf.mxu0
    %v1931 = vadd.f32 %v1904, %v1930
    %v1932 = vpop.f32.mrf.mxu0
    %1933 = vdwg.mxu0
    %v1934 = vpack.c.bf16 %v1931, %v1931
    %v1935 = vld [vmem:[%s15] sm:$0xf]
    %v1936 = vld [vmem:[%s15 + $0x4] sm:$0xf]
    %v1937 = vld [vmem:[%s15 + $0x8] sm:$0xf]
    %v1938 = vld [vmem:[%s15 + $0xc] sm:$0xf]
    %v1939 = vld [vmem:[%s16] sm:$0x1]
    %v1941 = vperm.slane %v1939, 0
    %v1947 = vunpack.c.l.b16 %v1935
    %v1948 = vunpack.c.l.b16 %v1936
    %v1949 = vunpack.c.l.b16 %v1937
    %v1950 = vunpack.c.l.b16 %v1938
    %v1951 = vpack.c.b16 %v1948, %v1947
    %v1952 = vpack.c.b16 %v1950, %v1949
    %v1956 = vsel %vm332, %v1934, 0
    %1958 = vmatpush.bf16.msra.mxu0 0
    %1959 = vmatpush.bf16.msra.mxu0 0
    %1960 = vmatpush.bf16.msra.mxu0 0
    %1961 = vmatpush.bf16.msra.mxu0 0
    %1962 = vmatpush.bf16.msra.mxu0 0
    %1963 = vmatpush.bf16.msra.mxu0 0
    %1964 = vmatpush.bf16.msra.mxu0 %v1952
    %1965 = vmatpush.bf16.msra.mxu0 %v1951
    %1966 = vmatmul.bf16.gmra.mxu0 %v1956
    %v1967 = vpop.f32.mrf.mxu0
    %v1968 = vadd.f32 %v1941, %v1967
    %v1969 = vpop.f32.mrf.mxu0
    %1970 = vdwg.mxu0
    %v1971 = vmax.f32 %v1968, 0.0
    %v1972 = vpack.c.bf16 %v1971, %v1971
    %v1973 = vld [vmem:[%s17] sm:$0xf]
    %v1974 = vld [vmem:[%s17 + $0x4] sm:$0xf]
    %v1975 = vld [vmem:[%s18] sm:$0x1]
    %v1977 = vperm.slane %v1975, 0
    %v1981 = vunpack.c.l.b16 %v1973
    %v1982 = vunpack.c.l.b16 %v1974
    %v1983 = vpack.c.b16 %v1982, %v1981
    %vm1985 = vcmask 130048
    %v1987 = vsel %vm1985, %v1972, 0
    %1989 = vmatpush.bf16.msra.mxu0 0
    %1990 = vmatpush.bf16.msra.mxu0 0
    %1991 = vmatpush.bf16.msra.mxu0 0
    %1992 = vmatpush.bf16.msra.mxu0 0
    %1993 = vmatpush.bf16.msra.mxu0 0
    %1994 = vmatpush.bf16.msra.mxu0 0
    %1995 = vmatpush.bf16.msra.mxu0 0
    %1996 = vmatpush.bf16.msra.mxu0 %v1983
    %1997 = vmatmul.bf16.gmra.mxu0 %v1987
    %v1998 = vpop.f32.mrf.mxu0
    %v1999 = vadd.f32 %v1977, %v1998
    %v2000 = vpop.f32.mrf.mxu0
    %2001 = vdwg.mxu0
    %vm2002 = vcmask 23552
    %2003 = vst.msk [vmem:[%s21] sm:$0xff] %vm2002, %v1999
    // Predicated region
    $region130: #{_lambda_.1} parent=1 // pred_check
      _
    $region131: #{_lambda_.1} parent=1 // pred_check_branch
      %2005 = sbr.rel (0) target = $region133
    $region132: #{_lambda_.1} parent=1 // pred_region
      _
    $region133: #{_lambda_.1} parent=1 // pred_fallthru
      _
    // Predicated region
    $region134: #{_lambda_.1} parent=1 // pred_check
      _
    $region135: #{_lambda_.1} parent=1 // pred_check_branch
      %2007 = sbr.rel (0) target = $region137
    $region136: #{_lambda_.1} parent=1 // pred_region
      _
    $region137: #{_lambda_.1} parent=1 // pred_fallthru
      _
    %2008 = vsyncpa [#allocation5], 1
    %2009 = vsyncpa [#allocation7], 1
    %2010 = vsyncpa [#allocation10], 1
    %2011 = vsyncpa [#allocation13], 1
    %2012 = vsyncpa [#allocation16], 1
    %2013 = vsyncpa [#allocation19], 1

</llo_original>
